<compile_context>
chip_gen: v7x
topology: tpu7x:2x2x1
jax: 0.10.0
libtpu: 0.0.40
codegen_flags: <defaults>
</compile_context>

<pallas_src>
import functools

import jax
import jax.numpy as jnp
from jax.experimental import pallas as pl
from jax.experimental.pallas import tpu as pltpu


_LANE = 128
_SUBLANE = 8
_ISSUE_UNROLL = 8
_NSPLIT = 2                      # leading "parallel" grid extent (one per v7x TC)
_MAX_IDX_PER_CALL = 64 * 1024    # SMEM scalar-prefetch capacity guard


def _round_up(x, m):
    return ((x + m - 1) // m) * m


def _cdiv(a, b):
    return (a + b - 1) // b


def _make_transe_kernel(tile_b, tiles_per_split, p_norm):
    """Build the fused gather + score kernel for a given tiling / p-norm."""
    unroll = _ISSUE_UNROLL
    assert tile_b % unroll == 0

    def kernel(h_idx, t_idx, r_idx,      # scalar-prefetch (SMEM) int32 [b_pad]
               ent_hbm, rel_ref,         # entity table in HBM (ANY); rel table VMEM-resident
               o_ref,                    # VMEM output block [tile_b, 1] f32
               h_buf, t_buf,             # VMEM double-buffered gather scratch [2, tile_b, D]
               r_buf,                    # VMEM relation gather scratch [tile_b, D]
               sem):                     # DMA semaphores [2 slots, 2 tables]
        c = pl.program_id(0)             # split axis ("parallel", per TensorCore)
        j = pl.program_id(1)             # tile-within-split axis ("arbitrary")
        n_j = pl.num_programs(1)

        def issue_tile(tile, slot):
            """Enqueue the 2*tile_b HBM row gathers (h and t) for one tile."""
            base = tile * tile_b

            @pl.loop(0, tile_b // unroll)
            def _issue(jj):
                j0 = jj * unroll
                # Unrolled so adjacent rows' SMEM reads + descriptor pushes co-issue.
                # NOTE: up to 2 tiles * 2 tables * tile_b copies are in flight at once;
                # if tile_b is pushed well past ~1K, issue/wait in waves instead.
                for u in range(unroll):
                    row = j0 + u
                    row_h = h_idx[base + row]
                    row_t = t_idx[base + row]
                    pltpu.make_async_copy(
                        ent_hbm.at[pl.ds(row_h, 1)],
                        h_buf.at[slot, pl.ds(row, 1)],
                        sem.at[slot, 0]).start()
                    pltpu.make_async_copy(
                        ent_hbm.at[pl.ds(row_t, 1)],
                        t_buf.at[slot, pl.ds(row, 1)],
                        sem.at[slot, 1]).start()

        # Prime the pipeline on this core's first tile (works whether or not the
        # leading parallel axis is actually split across TensorCores).
        @pl.when(j == 0)
        def _():
            issue_tile(c * tiles_per_split, 0)

        # Prefetch the NEXT tile before waiting on the current one so its HBM
        # gather latency hides behind this step's wait + compute.
        @pl.when(j + 1 < n_j)
        def _():
            issue_tile(c * tiles_per_split + j + 1, (j + 1) % 2)

        # On-chip relation gather: rel table is VMEM-resident, so these are pure
        # vector loads/stores (no DMA descriptors) and they overlap the in-flight
        # h/t copies.  All SMEM index reads happen before any DMA wait.
        base = (c * tiles_per_split + j) * tile_b

        @pl.loop(0, tile_b // unroll)
        def _gather_r(jj):
            j0 = jj * unroll
            for u in range(unroll):
                row = j0 + u
                row_r = r_idx[base + row]
                r_buf[pl.ds(row, 1), :] = rel_ref[pl.ds(row_r, 1), :]

        # Aggregate waits: one wait per (slot, table).  DMA semaphores count
        # bytes, and tile_b completed (1, D) row copies equal exactly one
        # full-buffer descriptor (same pattern as the paged-attention
        # multi-page gather: wait with src = dst = the VMEM buffer).
        slot = j % 2
        pltpu.make_async_copy(h_buf.at[slot], h_buf.at[slot], sem.at[slot, 0]).wait()
        pltpu.make_async_copy(t_buf.at[slot], t_buf.at[slot], sem.at[slot, 1]).wait()

        # Hot path: h + r - t and the Lp reduction over the embedding dim.
        # Always accumulate in f32 (tables may be stored in bf16).
        h = h_buf[slot].astype(jnp.float32)
        t = t_buf[slot].astype(jnp.float32)
        r = r_buf[...].astype(jnp.float32)
        s = h + r - t
        if p_norm == 1:
            score = jnp.sum(jnp.abs(s), axis=-1, keepdims=True)
        else:  # p_norm == 2
            score = jnp.sqrt(jnp.sum(s * s, axis=-1, keepdims=True))
        o_ref[...] = score.astype(o_ref.dtype)

    return kernel


def _transe_score_chunk(batch_h, batch_t, batch_r, ent_emb, rel_emb, p_norm, tile_b):
    """One pallas_call over a (<= _MAX_IDX_PER_CALL) chunk of the batch."""
    B = batch_h.shape[0]
    d_pad = ent_emb.shape[1]
    assert d_pad % _LANE == 0 and rel_emb.shape[1] == d_pad

    # Tile sizing: big enough to amortise the ~0.35us per-grid-step overhead,
    # small enough that both halves of the split axis (v7x: both TensorCores)
    # get real rows.  Always a sublane multiple.
    tile_b = max(_SUBLANE, min(tile_b, B))
    tile_b = min(tile_b, _round_up(_cdiv(B, _NSPLIT), _SUBLANE))
    tile_b = _round_up(tile_b, _SUBLANE)

    total_tiles = _cdiv(B, tile_b)
    tiles_per_split = _cdiv(total_tiles, _NSPLIT)
    b_pad = _NSPLIT * tiles_per_split * tile_b

    def _prep_idx(idx):
        idx = idx.astype(jnp.int32).reshape(-1)
        if b_pad != B:
            idx = jnp.pad(idx, (0, b_pad - B))   # pad with a valid row (0); sliced off below
        return idx

    h_idx = _prep_idx(batch_h)
    t_idx = _prep_idx(batch_t)
    r_idx = _prep_idx(batch_r)

    itemsize = jnp.dtype(ent_emb.dtype).itemsize
    rel_rows = rel_emb.shape[0]
    # h/t double-buffered + r buffer, rel table double-buffered by the pipeline,
    # plus headroom for output / compiler scratch.  Cap well below v7x's 64 MiB
    # physical VMEM; lift v5e's 16 MiB scoped default.
    need = (5 * tile_b * d_pad + 2 * rel_rows * d_pad) * itemsize + (16 << 20)
    vmem_limit = int(min(max(need, 32 << 20), 48 << 20))

    # TODO(synk): fall back to HBM DMA-gather for the relation table if
    # rel_tot * D_pad ever exceeds the VMEM budget (rare for KG relation sets).

    out = pl.pallas_call(
        _make_transe_kernel(tile_b, tiles_per_split, p_norm),
        out_shape=jax.ShapeDtypeStruct((b_pad, 1), jnp.float32),
        grid_spec=pltpu.PrefetchScalarGridSpec(
            num_scalar_prefetch=3,                     # batch_h, batch_t, batch_r -> SMEM
            grid=(_NSPLIT, tiles_per_split),
            in_specs=[
                pl.BlockSpec(memory_space=pl.ANY),     # entity table stays in HBM
                pl.BlockSpec((rel_rows, d_pad),        # relation table: VMEM-resident,
                             lambda c, j, *_: (0, 0)),  # fetched once (constant block index)
            ],
            out_specs=pl.BlockSpec(
                (tile_b, 1),
                lambda c, j, *_: (c * tiles_per_split + j, 0)),
            scratch_shapes=[
                pltpu.VMEM((2, tile_b, d_pad), ent_emb.dtype),   # h gather (double-buffered)
                pltpu.VMEM((2, tile_b, d_pad), ent_emb.dtype),   # t gather (double-buffered)
                pltpu.VMEM((tile_b, d_pad), rel_emb.dtype),      # r gather
                pltpu.SemaphoreType.DMA((2, 2)),                 # [slot, {h, t}]
            ],
        ),
        compiler_params=pltpu.CompilerParams(
            # Leading extent-2 axis shards across both TensorCores on v7x
            # (no-op on single-TC v5e/v6e); inner pipelined axis is sequential.
            dimension_semantics=("parallel", "arbitrary"),
            vmem_limit_bytes=vmem_limit,
        ),
    )(h_idx, t_idx, r_idx, ent_emb, rel_emb)
    return out.reshape(-1)[:B]


@functools.partial(jax.jit, static_argnames=("p_norm", "tile_b"))
def transe_score(batch_h, batch_t, batch_r, ent_emb, rel_emb, *,
                 p_norm=1, tile_b=512):
    """Fused TransE score: || ent[h] + rel[r] - ent[t] ||_p per batch row.

    batch_h/t/r : [B] integer indices.
    ent_emb     : [ent_tot, D] float32 or bfloat16 (ideally pre-padded so D is a
                  multiple of 128; zero padding does not change an Lp norm).
    rel_emb     : [rel_tot, D] same dtype / padding as ent_emb.
    Returns [B] float32.
    """
    assert p_norm in (1, 2), "only p_norm in {1, 2} implemented"
    B = batch_h.shape[0]
    d = ent_emb.shape[1]
    d_pad = _round_up(d, _LANE)
    if d_pad != d:
        # Slow path: tables should be pre-padded once at init (TransEPallas does
        # this); padding here re-materialises the full tables every call.
        ent_emb = jnp.pad(ent_emb, ((0, 0), (0, d_pad - d)))
        rel_emb = jnp.pad(rel_emb, ((0, 0), (0, d_pad - d)))

    # Chunk very large batches so the scalar-prefetch index arrays fit in SMEM.
    outs = []
    for s in range(0, B, _MAX_IDX_PER_CALL):
        e = min(B, s + _MAX_IDX_PER_CALL)
        outs.append(_transe_score_chunk(batch_h[s:e], batch_t[s:e], batch_r[s:e],
                                        ent_emb, rel_emb, p_norm, tile_b))
    return outs[0] if len(outs) == 1 else jnp.concatenate(outs)


class TransEPallas:
    """JAX/Pallas reimplementation of the TransE forward pass.

    Matches the provided PyTorch module: `_calc` computes ||h + r - t||_p with
    no embedding normalization (norm_flag is stored but never applied in
    forward, exactly as in the reference code).
    """

    def __init__(self, ent_tot, rel_tot, dim=100, p_norm=1, norm_flag=True,
                 margin=None, epsilon=None, embedding_dtype=jnp.float32,
                 tile_b=512, key=None):
        assert p_norm in (1, 2), "only p_norm in {1, 2} implemented"
        self.ent_tot = ent_tot
        self.rel_tot = rel_tot
        self.dim = dim
        self.p_norm = p_norm
        self.norm_flag = norm_flag          # stored; unused, as in reference _calc
        self.margin_flag = margin is not None
        self.tile_b = tile_b

        if key is None:
            key = jax.random.PRNGKey(0)
        k_ent, k_rel = jax.random.split(key)

        if margin is None or epsilon is None:
            # xavier_uniform_: bound = sqrt(6 / (fan_in + fan_out))
            ent_bound = (6.0 / (ent_tot + dim)) ** 0.5
            rel_bound = (6.0 / (rel_tot + dim)) ** 0.5
        else:
            rng = (margin + epsilon) / dim
            ent_bound = rel_bound = rng

        ent = jax.random.uniform(k_ent, (ent_tot, dim), jnp.float32,
                                 -ent_bound, ent_bound)
        rel = jax.random.uniform(k_rel, (rel_tot, dim), jnp.float32,
                                 -rel_bound, rel_bound)
        # "Parameters" (unpadded, float32) — what the PyTorch module exposes.
        self.ent_embeddings = ent
        self.rel_embeddings = rel
        # Kernel-side tables: dim padded ONCE here to a multiple of 128 lanes
        # (zeros do not change any Lp norm) and optionally stored in bfloat16
        # to halve HBM traffic (most useful on bandwidth-poorer v5e).
        # NOTE: bf16 storage makes scores differ slightly from the float32
        # parameters above; use looser tolerances when comparing.
        d_pad = _round_up(dim, _LANE)
        pad = ((0, 0), (0, d_pad - dim))
        self._ent_table = jnp.pad(ent, pad).astype(embedding_dtype)
        self._rel_table = jnp.pad(rel, pad).astype(embedding_dtype)
        self.margin = jnp.float32(margin) if margin is not None else None

    def forward(self, data):
        score = transe_score(
            data["batch_h"], data["batch_t"], data["batch_r"],
            self._ent_table, self._rel_table,
            p_norm=self.p_norm, tile_b=self.tile_b)
        if self.margin_flag:
            return self.margin - score
        return score

    __call__ = forward

    def regularization(self, data):
        # Plain-JAX glue (tiny, not a hot path).
        h = jnp.take(self.ent_embeddings, data["batch_h"], axis=0)
        t = jnp.take(self.ent_embeddings, data["batch_t"], axis=0)
        r = jnp.take(self.rel_embeddings, data["batch_r"], axis=0)
        return (jnp.mean(h ** 2) + jnp.mean(t ** 2) + jnp.mean(r ** 2)) / 3.0

    def predict(self, data):
        score = self.forward(data)
        if self.margin_flag:
            score = self.margin - score
        return jax.device_get(score)


if __name__ == "__main__":
    # Small, deterministic example shapes.  dim=100 exercises the pad-to-128
    # path; batch=50 with tile_b=16 exercises the 2-way split grid, the
    # cross-step pipelining, and the non-divisible tail (index padding).
    ENT_TOT, REL_TOT, DIM, BATCH = 50, 12, 100, 50

    key = jax.random.PRNGKey(0)
    k_model, k_h, k_t, k_r = jax.random.split(key, 4)

    data = {
        "batch_h": jax.random.randint(k_h, (BATCH,), 0, ENT_TOT, dtype=jnp.int32),
        "batch_t": jax.random.randint(k_t, (BATCH,), 0, ENT_TOT, dtype=jnp.int32),
        "batch_r": jax.random.randint(k_r, (BATCH,), 0, REL_TOT, dtype=jnp.int32),
    }

    all_ok = True
    for p_norm in (1, 2):
        model = TransEPallas(ENT_TOT, REL_TOT, dim=DIM, p_norm=p_norm, tile_b=16,
                             key=k_model)
        score = model(data)
        jax.block_until_ready(score)

        # Reference in plain JAX (same semantics as the PyTorch forward / _calc,
        # computed from the unpadded float32 embeddings).
        h = jnp.take(model.ent_embeddings, data["batch_h"], axis=0)
        t = jnp.take(model.ent_embeddings, data["batch_t"], axis=0)
        r = jnp.take(model.rel_embeddings, data["batch_r"], axis=0)
        diff = h + r - t
        if p_norm == 1:
            ref = jnp.sum(jnp.abs(diff), axis=-1).reshape(-1)
        else:
            ref = jnp.sqrt(jnp.sum(diff * diff, axis=-1)).reshape(-1)

        all_ok &= (score.shape == (BATCH,))
        all_ok &= bool(jnp.allclose(score, ref, atol=1e-4, rtol=1e-4))

    assert all_ok
    print("KERNEL_OK")
</pallas_src>

<mosaic_0001>
module attributes {stable_mosaic.version = 11 : i64} {
  func.func @kernel(%arg0: i32, %arg1: i32, %arg2: memref<64xi32, #tpu.memory_space<smem>>, %arg3: memref<64xi32, #tpu.memory_space<smem>>, %arg4: memref<64xi32, #tpu.memory_space<smem>>, %arg5: memref<50x128xf32, #tpu.memory_space<any>>, %arg6: memref<12x128xf32, #tpu.memory_space<vmem>>, %arg7: memref<16x1xf32, #tpu.memory_space<vmem>>, %arg8: memref<2x16x128xf32, #tpu.memory_space<vmem>>, %arg9: memref<2x16x128xf32, #tpu.memory_space<vmem>>, %arg10: memref<16x128xf32, #tpu.memory_space<vmem>>, %arg11: memref<2x2x!tpu.dma_semaphore, #tpu.memory_space<semaphore_mem>>) attributes {dimension_semantics = [#tpu.dimension_semantics<parallel>, #tpu.dimension_semantics<arbitrary>], iteration_bounds = array<i64: 2, 2>, scalar_prefetch = 3 : i64, scratch_operands = 4 : i64, tpu.core_type = #tpu.core_type<tc>, window_params = [{}, {pipeline_mode = #tpu.pipeline_mode<synchronous>, transform_indices = @transform_1, window_bounds = array<i64: 12, 128>}, {transform_indices = @transform_2, window_bounds = array<i64: 16, 1>}]} {
    %c0_i32 = arith.constant 0 : i32
    %0 = arith.cmpi eq, %arg1, %c0_i32 : i32
    %1 = arith.extui %0 : i1 to i32
    %c0_i32_0 = arith.constant 0 : i32
    %2 = arith.cmpi ne, %1, %c0_i32_0 : i32
    scf.if %2 {
      %c2_i32_30 = arith.constant 2 : i32
      %46 = arith.muli %arg0, %c2_i32_30 : i32
      %c16_i32_31 = arith.constant 16 : i32
      %47 = arith.muli %46, %c16_i32_31 : i32
      %c0_i32_32 = arith.constant 0 : i32
      %c2_i32_33 = arith.constant 2 : i32
      %48 = arith.addi %c0_i32_32, %c2_i32_33 : i32
      %c1_i32_34 = arith.constant 1 : i32
      scf.for %arg12 = %c0_i32_32 to %48 step %c1_i32_34  : i32 {
        %c1_i32_36 = arith.constant 1 : i32
        %49 = arith.muli %arg12, %c1_i32_36 : i32
        %c0_i32_37 = arith.constant 0 : i32
        %50 = arith.addi %c0_i32_37, %49 : i32
        %c8_i32 = arith.constant 8 : i32
        %51 = arith.muli %50, %c8_i32 : i32
        %c0_i32_38 = arith.constant 0 : i32
        %52 = arith.addi %51, %c0_i32_38 : i32
        %53 = arith.addi %47, %52 : i32
        %54 = arith.index_cast %53 : i32 to index
        %55 = memref.load %arg2[%54] : memref<64xi32, #tpu.memory_space<smem>>
        %56 = arith.addi %47, %52 : i32
        %57 = arith.index_cast %56 : i32 to index
        %58 = memref.load %arg3[%57] : memref<64xi32, #tpu.memory_space<smem>>
        %c0_i32_39 = arith.constant 0 : i32
        %c0_i32_40 = arith.constant 0 : i32
        %c0_i32_41 = arith.constant 0 : i32
        %c0_i32_42 = arith.constant 0 : i32
        %59 = tpu.memref_slice %arg5[%55, %c0_i32_42] : memref<50x128xf32, #tpu.memory_space<any>> -> memref<1x128xf32, #tpu.memory_space<any>>
        %c0_i32_43 = arith.constant 0 : i32
        %60 = tpu.memref_slice %arg8[%c0_i32_39, %52, %c0_i32_43] : memref<2x16x128xf32, #tpu.memory_space<vmem>> -> memref<1x1x128xf32, #tpu.memory_space<vmem>>
        %61 = tpu.memref_squeeze %60 : memref<1x1x128xf32, #tpu.memory_space<vmem>> -> memref<1x128xf32, #tpu.memory_space<vmem>>
        %62 = tpu.memref_slice %arg11[%c0_i32_40, %c0_i32_41] : memref<2x2x!tpu.dma_semaphore, #tpu.memory_space<semaphore_mem>> -> memref<1x1x!tpu.dma_semaphore, #tpu.memory_space<semaphore_mem>>
        %63 = tpu.memref_squeeze %62 : memref<1x1x!tpu.dma_semaphore, #tpu.memory_space<semaphore_mem>> -> memref<!tpu.dma_semaphore, #tpu.memory_space<semaphore_mem>>
        tpu.enqueue_dma source(%59 : memref<1x128xf32, #tpu.memory_space<any>>) target(%61 : memref<1x128xf32, #tpu.memory_space<vmem>>) target_semaphore(%63 : memref<!tpu.dma_semaphore, #tpu.memory_space<semaphore_mem>>)
        %c0_i32_44 = arith.constant 0 : i32
        %c0_i32_45 = arith.constant 0 : i32
        %c1_i32_46 = arith.constant 1 : i32
        %c0_i32_47 = arith.constant 0 : i32
        %64 = tpu.memref_slice %arg5[%58, %c0_i32_47] : memref<50x128xf32, #tpu.memory_space<any>> -> memref<1x128xf32, #tpu.memory_space<any>>
        %c0_i32_48 = arith.constant 0 : i32
        %65 = tpu.memref_slice %arg9[%c0_i32_44, %52, %c0_i32_48] : memref<2x16x128xf32, #tpu.memory_space<vmem>> -> memref<1x1x128xf32, #tpu.memory_space<vmem>>
        %66 = tpu.memref_squeeze %65 : memref<1x1x128xf32, #tpu.memory_space<vmem>> -> memref<1x128xf32, #tpu.memory_space<vmem>>
        %67 = tpu.memref_slice %arg11[%c0_i32_45, %c1_i32_46] : memref<2x2x!tpu.dma_semaphore, #tpu.memory_space<semaphore_mem>> -> memref<1x1x!tpu.dma_semaphore, #tpu.memory_space<semaphore_mem>>
        %68 = tpu.memref_squeeze %67 : memref<1x1x!tpu.dma_semaphore, #tpu.memory_space<semaphore_mem>> -> memref<!tpu.dma_semaphore, #tpu.memory_space<semaphore_mem>>
        tpu.enqueue_dma source(%64 : memref<1x128xf32, #tpu.memory_space<any>>) target(%66 : memref<1x128xf32, #tpu.memory_space<vmem>>) target_semaphore(%68 : memref<!tpu.dma_semaphore, #tpu.memory_space<semaphore_mem>>)
        %c1_i32_49 = arith.constant 1 : i32
        %69 = arith.addi %51, %c1_i32_49 : i32
        %70 = arith.addi %47, %69 : i32
        %71 = arith.index_cast %70 : i32 to index
        %72 = memref.load %arg2[%71] : memref<64xi32, #tpu.memory_space<smem>>
        %73 = arith.addi %47, %69 : i32
        %74 = arith.index_cast %73 : i32 to index
        %75 = memref.load %arg3[%74] : memref<64xi32, #tpu.memory_space<smem>>
        %c0_i32_50 = arith.constant 0 : i32
        %c0_i32_51 = arith.constant 0 : i32
        %c0_i32_52 = arith.constant 0 : i32
        %c0_i32_53 = arith.constant 0 : i32
        %76 = tpu.memref_slice %arg5[%72, %c0_i32_53] : memref<50x128xf32, #tpu.memory_space<any>> -> memref<1x128xf32, #tpu.memory_space<any>>
        %c0_i32_54 = arith.constant 0 : i32
        %77 = tpu.memref_slice %arg8[%c0_i32_50, %69, %c0_i32_54] : memref<2x16x128xf32, #tpu.memory_space<vmem>> -> memref<1x1x128xf32, #tpu.memory_space<vmem>>
        %78 = tpu.memref_squeeze %77 : memref<1x1x128xf32, #tpu.memory_space<vmem>> -> memref<1x128xf32, #tpu.memory_space<vmem>>
        %79 = tpu.memref_slice %arg11[%c0_i32_51, %c0_i32_52] : memref<2x2x!tpu.dma_semaphore, #tpu.memory_space<semaphore_mem>> -> memref<1x1x!tpu.dma_semaphore, #tpu.memory_space<semaphore_mem>>
        %80 = tpu.memref_squeeze %79 : memref<1x1x!tpu.dma_semaphore, #tpu.memory_space<semaphore_mem>> -> memref<!tpu.dma_semaphore, #tpu.memory_space<semaphore_mem>>
        tpu.enqueue_dma source(%76 : memref<1x128xf32, #tpu.memory_space<any>>) target(%78 : memref<1x128xf32, #tpu.memory_space<vmem>>) target_semaphore(%80 : memref<!tpu.dma_semaphore, #tpu.memory_space<semaphore_mem>>)
        %c0_i32_55 = arith.constant 0 : i32
        %c0_i32_56 = arith.constant 0 : i32
        %c1_i32_57 = arith.constant 1 : i32
        %c0_i32_58 = arith.constant 0 : i32
        %81 = tpu.memref_slice %arg5[%75, %c0_i32_58] : memref<50x128xf32, #tpu.memory_space<any>> -> memref<1x128xf32, #tpu.memory_space<any>>
        %c0_i32_59 = arith.constant 0 : i32
        %82 = tpu.memref_slice %arg9[%c0_i32_55, %69, %c0_i32_59] : memref<2x16x128xf32, #tpu.memory_space<vmem>> -> memref<1x1x128xf32, #tpu.memory_space<vmem>>
        %83 = tpu.memref_squeeze %82 : memref<1x1x128xf32, #tpu.memory_space<vmem>> -> memref<1x128xf32, #tpu.memory_space<vmem>>
        %84 = tpu.memref_slice %arg11[%c0_i32_56, %c1_i32_57] : memref<2x2x!tpu.dma_semaphore, #tpu.memory_space<semaphore_mem>> -> memref<1x1x!tpu.dma_semaphore, #tpu.memory_space<semaphore_mem>>
        %85 = tpu.memref_squeeze %84 : memref<1x1x!tpu.dma_semaphore, #tpu.memory_space<semaphore_mem>> -> memref<!tpu.dma_semaphore, #tpu.memory_space<semaphore_mem>>
        tpu.enqueue_dma source(%81 : memref<1x128xf32, #tpu.memory_space<any>>) target(%83 : memref<1x128xf32, #tpu.memory_space<vmem>>) target_semaphore(%85 : memref<!tpu.dma_semaphore, #tpu.memory_space<semaphore_mem>>)
        %c2_i32_60 = arith.constant 2 : i32
        %86 = arith.addi %51, %c2_i32_60 : i32
        %87 = arith.addi %47, %86 : i32
        %88 = arith.index_cast %87 : i32 to index
        %89 = memref.load %arg2[%88] : memref<64xi32, #tpu.memory_space<smem>>
        %90 = arith.addi %47, %86 : i32
        %91 = arith.index_cast %90 : i32 to index
        %92 = memref.load %arg3[%91] : memref<64xi32, #tpu.memory_space<smem>>
        %c0_i32_61 = arith.constant 0 : i32
        %c0_i32_62 = arith.constant 0 : i32
        %c0_i32_63 = arith.constant 0 : i32
        %c0_i32_64 = arith.constant 0 : i32
        %93 = tpu.memref_slice %arg5[%89, %c0_i32_64] : memref<50x128xf32, #tpu.memory_space<any>> -> memref<1x128xf32, #tpu.memory_space<any>>
        %c0_i32_65 = arith.constant 0 : i32
        %94 = tpu.memref_slice %arg8[%c0_i32_61, %86, %c0_i32_65] : memref<2x16x128xf32, #tpu.memory_space<vmem>> -> memref<1x1x128xf32, #tpu.memory_space<vmem>>
        %95 = tpu.memref_squeeze %94 : memref<1x1x128xf32, #tpu.memory_space<vmem>> -> memref<1x128xf32, #tpu.memory_space<vmem>>
        %96 = tpu.memref_slice %arg11[%c0_i32_62, %c0_i32_63] : memref<2x2x!tpu.dma_semaphore, #tpu.memory_space<semaphore_mem>> -> memref<1x1x!tpu.dma_semaphore, #tpu.memory_space<semaphore_mem>>
        %97 = tpu.memref_squeeze %96 : memref<1x1x!tpu.dma_semaphore, #tpu.memory_space<semaphore_mem>> -> memref<!tpu.dma_semaphore, #tpu.memory_space<semaphore_mem>>
        tpu.enqueue_dma source(%93 : memref<1x128xf32, #tpu.memory_space<any>>) target(%95 : memref<1x128xf32, #tpu.memory_space<vmem>>) target_semaphore(%97 : memref<!tpu.dma_semaphore, #tpu.memory_space<semaphore_mem>>)
        %c0_i32_66 = arith.constant 0 : i32
        %c0_i32_67 = arith.constant 0 : i32
        %c1_i32_68 = arith.constant 1 : i32
        %c0_i32_69 = arith.constant 0 : i32
        %98 = tpu.memref_slice %arg5[%92, %c0_i32_69] : memref<50x128xf32, #tpu.memory_space<any>> -> memref<1x128xf32, #tpu.memory_space<any>>
        %c0_i32_70 = arith.constant 0 : i32
        %99 = tpu.memref_slice %arg9[%c0_i32_66, %86, %c0_i32_70] : memref<2x16x128xf32, #tpu.memory_space<vmem>> -> memref<1x1x128xf32, #tpu.memory_space<vmem>>
        %100 = tpu.memref_squeeze %99 : memref<1x1x128xf32, #tpu.memory_space<vmem>> -> memref<1x128xf32, #tpu.memory_space<vmem>>
        %101 = tpu.memref_slice %arg11[%c0_i32_67, %c1_i32_68] : memref<2x2x!tpu.dma_semaphore, #tpu.memory_space<semaphore_mem>> -> memref<1x1x!tpu.dma_semaphore, #tpu.memory_space<semaphore_mem>>
        %102 = tpu.memref_squeeze %101 : memref<1x1x!tpu.dma_semaphore, #tpu.memory_space<semaphore_mem>> -> memref<!tpu.dma_semaphore, #tpu.memory_space<semaphore_mem>>
        tpu.enqueue_dma source(%98 : memref<1x128xf32, #tpu.memory_space<any>>) target(%100 : memref<1x128xf32, #tpu.memory_space<vmem>>) target_semaphore(%102 : memref<!tpu.dma_semaphore, #tpu.memory_space<semaphore_mem>>)
        %c3_i32 = arith.constant 3 : i32
        %103 = arith.addi %51, %c3_i32 : i32
        %104 = arith.addi %47, %103 : i32
        %105 = arith.index_cast %104 : i32 to index
        %106 = memref.load %arg2[%105] : memref<64xi32, #tpu.memory_space<smem>>
        %107 = arith.addi %47, %103 : i32
        %108 = arith.index_cast %107 : i32 to index
        %109 = memref.load %arg3[%108] : memref<64xi32, #tpu.memory_space<smem>>
        %c0_i32_71 = arith.constant 0 : i32
        %c0_i32_72 = arith.constant 0 : i32
        %c0_i32_73 = arith.constant 0 : i32
        %c0_i32_74 = arith.constant 0 : i32
        %110 = tpu.memref_slice %arg5[%106, %c0_i32_74] : memref<50x128xf32, #tpu.memory_space<any>> -> memref<1x128xf32, #tpu.memory_space<any>>
        %c0_i32_75 = arith.constant 0 : i32
        %111 = tpu.memref_slice %arg8[%c0_i32_71, %103, %c0_i32_75] : memref<2x16x128xf32, #tpu.memory_space<vmem>> -> memref<1x1x128xf32, #tpu.memory_space<vmem>>
        %112 = tpu.memref_squeeze %111 : memref<1x1x128xf32, #tpu.memory_space<vmem>> -> memref<1x128xf32, #tpu.memory_space<vmem>>
        %113 = tpu.memref_slice %arg11[%c0_i32_72, %c0_i32_73] : memref<2x2x!tpu.dma_semaphore, #tpu.memory_space<semaphore_mem>> -> memref<1x1x!tpu.dma_semaphore, #tpu.memory_space<semaphore_mem>>
        %114 = tpu.memref_squeeze %113 : memref<1x1x!tpu.dma_semaphore, #tpu.memory_space<semaphore_mem>> -> memref<!tpu.dma_semaphore, #tpu.memory_space<semaphore_mem>>
        tpu.enqueue_dma source(%110 : memref<1x128xf32, #tpu.memory_space<any>>) target(%112 : memref<1x128xf32, #tpu.memory_space<vmem>>) target_semaphore(%114 : memref<!tpu.dma_semaphore, #tpu.memory_space<semaphore_mem>>)
        %c0_i32_76 = arith.constant 0 : i32
        %c0_i32_77 = arith.constant 0 : i32
        %c1_i32_78 = arith.constant 1 : i32
        %c0_i32_79 = arith.constant 0 : i32
        %115 = tpu.memref_slice %arg5[%109, %c0_i32_79] : memref<50x128xf32, #tpu.memory_space<any>> -> memref<1x128xf32, #tpu.memory_space<any>>
        %c0_i32_80 = arith.constant 0 : i32
        %116 = tpu.memref_slice %arg9[%c0_i32_76, %103, %c0_i32_80] : memref<2x16x128xf32, #tpu.memory_space<vmem>> -> memref<1x1x128xf32, #tpu.memory_space<vmem>>
        %117 = tpu.memref_squeeze %116 : memref<1x1x128xf32, #tpu.memory_space<vmem>> -> memref<1x128xf32, #tpu.memory_space<vmem>>
        %118 = tpu.memref_slice %arg11[%c0_i32_77, %c1_i32_78] : memref<2x2x!tpu.dma_semaphore, #tpu.memory_space<semaphore_mem>> -> memref<1x1x!tpu.dma_semaphore, #tpu.memory_space<semaphore_mem>>
        %119 = tpu.memref_squeeze %118 : memref<1x1x!tpu.dma_semaphore, #tpu.memory_space<semaphore_mem>> -> memref<!tpu.dma_semaphore, #tpu.memory_space<semaphore_mem>>
        tpu.enqueue_dma source(%115 : memref<1x128xf32, #tpu.memory_space<any>>) target(%117 : memref<1x128xf32, #tpu.memory_space<vmem>>) target_semaphore(%119 : memref<!tpu.dma_semaphore, #tpu.memory_space<semaphore_mem>>)
        %c4_i32 = arith.constant 4 : i32
        %120 = arith.addi %51, %c4_i32 : i32
        %121 = arith.addi %47, %120 : i32
        %122 = arith.index_cast %121 : i32 to index
        %123 = memref.load %arg2[%122] : memref<64xi32, #tpu.memory_space<smem>>
        %124 = arith.addi %47, %120 : i32
        %125 = arith.index_cast %124 : i32 to index
        %126 = memref.load %arg3[%125] : memref<64xi32, #tpu.memory_space<smem>>
        %c0_i32_81 = arith.constant 0 : i32
        %c0_i32_82 = arith.constant 0 : i32
        %c0_i32_83 = arith.constant 0 : i32
        %c0_i32_84 = arith.constant 0 : i32
        %127 = tpu.memref_slice %arg5[%123, %c0_i32_84] : memref<50x128xf32, #tpu.memory_space<any>> -> memref<1x128xf32, #tpu.memory_space<any>>
        %c0_i32_85 = arith.constant 0 : i32
        %128 = tpu.memref_slice %arg8[%c0_i32_81, %120, %c0_i32_85] : memref<2x16x128xf32, #tpu.memory_space<vmem>> -> memref<1x1x128xf32, #tpu.memory_space<vmem>>
        %129 = tpu.memref_squeeze %128 : memref<1x1x128xf32, #tpu.memory_space<vmem>> -> memref<1x128xf32, #tpu.memory_space<vmem>>
        %130 = tpu.memref_slice %arg11[%c0_i32_82, %c0_i32_83] : memref<2x2x!tpu.dma_semaphore, #tpu.memory_space<semaphore_mem>> -> memref<1x1x!tpu.dma_semaphore, #tpu.memory_space<semaphore_mem>>
        %131 = tpu.memref_squeeze %130 : memref<1x1x!tpu.dma_semaphore, #tpu.memory_space<semaphore_mem>> -> memref<!tpu.dma_semaphore, #tpu.memory_space<semaphore_mem>>
        tpu.enqueue_dma source(%127 : memref<1x128xf32, #tpu.memory_space<any>>) target(%129 : memref<1x128xf32, #tpu.memory_space<vmem>>) target_semaphore(%131 : memref<!tpu.dma_semaphore, #tpu.memory_space<semaphore_mem>>)
        %c0_i32_86 = arith.constant 0 : i32
        %c0_i32_87 = arith.constant 0 : i32
        %c1_i32_88 = arith.constant 1 : i32
        %c0_i32_89 = arith.constant 0 : i32
        %132 = tpu.memref_slice %arg5[%126, %c0_i32_89] : memref<50x128xf32, #tpu.memory_space<any>> -> memref<1x128xf32, #tpu.memory_space<any>>
        %c0_i32_90 = arith.constant 0 : i32
        %133 = tpu.memref_slice %arg9[%c0_i32_86, %120, %c0_i32_90] : memref<2x16x128xf32, #tpu.memory_space<vmem>> -> memref<1x1x128xf32, #tpu.memory_space<vmem>>
        %134 = tpu.memref_squeeze %133 : memref<1x1x128xf32, #tpu.memory_space<vmem>> -> memref<1x128xf32, #tpu.memory_space<vmem>>
        %135 = tpu.memref_slice %arg11[%c0_i32_87, %c1_i32_88] : memref<2x2x!tpu.dma_semaphore, #tpu.memory_space<semaphore_mem>> -> memref<1x1x!tpu.dma_semaphore, #tpu.memory_space<semaphore_mem>>
        %136 = tpu.memref_squeeze %135 : memref<1x1x!tpu.dma_semaphore, #tpu.memory_space<semaphore_mem>> -> memref<!tpu.dma_semaphore, #tpu.memory_space<semaphore_mem>>
        tpu.enqueue_dma source(%132 : memref<1x128xf32, #tpu.memory_space<any>>) target(%134 : memref<1x128xf32, #tpu.memory_space<vmem>>) target_semaphore(%136 : memref<!tpu.dma_semaphore, #tpu.memory_space<semaphore_mem>>)
        %c5_i32 = arith.constant 5 : i32
        %137 = arith.addi %51, %c5_i32 : i32
        %138 = arith.addi %47, %137 : i32
        %139 = arith.index_cast %138 : i32 to index
        %140 = memref.load %arg2[%139] : memref<64xi32, #tpu.memory_space<smem>>
        %141 = arith.addi %47, %137 : i32
        %142 = arith.index_cast %141 : i32 to index
        %143 = memref.load %arg3[%142] : memref<64xi32, #tpu.memory_space<smem>>
        %c0_i32_91 = arith.constant 0 : i32
        %c0_i32_92 = arith.constant 0 : i32
        %c0_i32_93 = arith.constant 0 : i32
        %c0_i32_94 = arith.constant 0 : i32
        %144 = tpu.memref_slice %arg5[%140, %c0_i32_94] : memref<50x128xf32, #tpu.memory_space<any>> -> memref<1x128xf32, #tpu.memory_space<any>>
        %c0_i32_95 = arith.constant 0 : i32
        %145 = tpu.memref_slice %arg8[%c0_i32_91, %137, %c0_i32_95] : memref<2x16x128xf32, #tpu.memory_space<vmem>> -> memref<1x1x128xf32, #tpu.memory_space<vmem>>
        %146 = tpu.memref_squeeze %145 : memref<1x1x128xf32, #tpu.memory_space<vmem>> -> memref<1x128xf32, #tpu.memory_space<vmem>>
        %147 = tpu.memref_slice %arg11[%c0_i32_92, %c0_i32_93] : memref<2x2x!tpu.dma_semaphore, #tpu.memory_space<semaphore_mem>> -> memref<1x1x!tpu.dma_semaphore, #tpu.memory_space<semaphore_mem>>
        %148 = tpu.memref_squeeze %147 : memref<1x1x!tpu.dma_semaphore, #tpu.memory_space<semaphore_mem>> -> memref<!tpu.dma_semaphore, #tpu.memory_space<semaphore_mem>>
        tpu.enqueue_dma source(%144 : memref<1x128xf32, #tpu.memory_space<any>>) target(%146 : memref<1x128xf32, #tpu.memory_space<vmem>>) target_semaphore(%148 : memref<!tpu.dma_semaphore, #tpu.memory_space<semaphore_mem>>)
        %c0_i32_96 = arith.constant 0 : i32
        %c0_i32_97 = arith.constant 0 : i32
        %c1_i32_98 = arith.constant 1 : i32
        %c0_i32_99 = arith.constant 0 : i32
        %149 = tpu.memref_slice %arg5[%143, %c0_i32_99] : memref<50x128xf32, #tpu.memory_space<any>> -> memref<1x128xf32, #tpu.memory_space<any>>
        %c0_i32_100 = arith.constant 0 : i32
        %150 = tpu.memref_slice %arg9[%c0_i32_96, %137, %c0_i32_100] : memref<2x16x128xf32, #tpu.memory_space<vmem>> -> memref<1x1x128xf32, #tpu.memory_space<vmem>>
        %151 = tpu.memref_squeeze %150 : memref<1x1x128xf32, #tpu.memory_space<vmem>> -> memref<1x128xf32, #tpu.memory_space<vmem>>
        %152 = tpu.memref_slice %arg11[%c0_i32_97, %c1_i32_98] : memref<2x2x!tpu.dma_semaphore, #tpu.memory_space<semaphore_mem>> -> memref<1x1x!tpu.dma_semaphore, #tpu.memory_space<semaphore_mem>>
        %153 = tpu.memref_squeeze %152 : memref<1x1x!tpu.dma_semaphore, #tpu.memory_space<semaphore_mem>> -> memref<!tpu.dma_semaphore, #tpu.memory_space<semaphore_mem>>
        tpu.enqueue_dma source(%149 : memref<1x128xf32, #tpu.memory_space<any>>) target(%151 : memref<1x128xf32, #tpu.memory_space<vmem>>) target_semaphore(%153 : memref<!tpu.dma_semaphore, #tpu.memory_space<semaphore_mem>>)
        %c6_i32 = arith.constant 6 : i32
        %154 = arith.addi %51, %c6_i32 : i32
        %155 = arith.addi %47, %154 : i32
        %156 = arith.index_cast %155 : i32 to index
        %157 = memref.load %arg2[%156] : memref<64xi32, #tpu.memory_space<smem>>
        %158 = arith.addi %47, %154 : i32
        %159 = arith.index_cast %158 : i32 to index
        %160 = memref.load %arg3[%159] : memref<64xi32, #tpu.memory_space<smem>>
        %c0_i32_101 = arith.constant 0 : i32
        %c0_i32_102 = arith.constant 0 : i32
        %c0_i32_103 = arith.constant 0 : i32
        %c0_i32_104 = arith.constant 0 : i32
        %161 = tpu.memref_slice %arg5[%157, %c0_i32_104] : memref<50x128xf32, #tpu.memory_space<any>> -> memref<1x128xf32, #tpu.memory_space<any>>
        %c0_i32_105 = arith.constant 0 : i32
        %162 = tpu.memref_slice %arg8[%c0_i32_101, %154, %c0_i32_105] : memref<2x16x128xf32, #tpu.memory_space<vmem>> -> memref<1x1x128xf32, #tpu.memory_space<vmem>>
        %163 = tpu.memref_squeeze %162 : memref<1x1x128xf32, #tpu.memory_space<vmem>> -> memref<1x128xf32, #tpu.memory_space<vmem>>
        %164 = tpu.memref_slice %arg11[%c0_i32_102, %c0_i32_103] : memref<2x2x!tpu.dma_semaphore, #tpu.memory_space<semaphore_mem>> -> memref<1x1x!tpu.dma_semaphore, #tpu.memory_space<semaphore_mem>>
        %165 = tpu.memref_squeeze %164 : memref<1x1x!tpu.dma_semaphore, #tpu.memory_space<semaphore_mem>> -> memref<!tpu.dma_semaphore, #tpu.memory_space<semaphore_mem>>
        tpu.enqueue_dma source(%161 : memref<1x128xf32, #tpu.memory_space<any>>) target(%163 : memref<1x128xf32, #tpu.memory_space<vmem>>) target_semaphore(%165 : memref<!tpu.dma_semaphore, #tpu.memory_space<semaphore_mem>>)
        %c0_i32_106 = arith.constant 0 : i32
        %c0_i32_107 = arith.constant 0 : i32
        %c1_i32_108 = arith.constant 1 : i32
        %c0_i32_109 = arith.constant 0 : i32
        %166 = tpu.memref_slice %arg5[%160, %c0_i32_109] : memref<50x128xf32, #tpu.memory_space<any>> -> memref<1x128xf32, #tpu.memory_space<any>>
        %c0_i32_110 = arith.constant 0 : i32
        %167 = tpu.memref_slice %arg9[%c0_i32_106, %154, %c0_i32_110] : memref<2x16x128xf32, #tpu.memory_space<vmem>> -> memref<1x1x128xf32, #tpu.memory_space<vmem>>
        %168 = tpu.memref_squeeze %167 : memref<1x1x128xf32, #tpu.memory_space<vmem>> -> memref<1x128xf32, #tpu.memory_space<vmem>>
        %169 = tpu.memref_slice %arg11[%c0_i32_107, %c1_i32_108] : memref<2x2x!tpu.dma_semaphore, #tpu.memory_space<semaphore_mem>> -> memref<1x1x!tpu.dma_semaphore, #tpu.memory_space<semaphore_mem>>
        %170 = tpu.memref_squeeze %169 : memref<1x1x!tpu.dma_semaphore, #tpu.memory_space<semaphore_mem>> -> memref<!tpu.dma_semaphore, #tpu.memory_space<semaphore_mem>>
        tpu.enqueue_dma source(%166 : memref<1x128xf32, #tpu.memory_space<any>>) target(%168 : memref<1x128xf32, #tpu.memory_space<vmem>>) target_semaphore(%170 : memref<!tpu.dma_semaphore, #tpu.memory_space<semaphore_mem>>)
        %c7_i32 = arith.constant 7 : i32
        %171 = arith.addi %51, %c7_i32 : i32
        %172 = arith.addi %47, %171 : i32
        %173 = arith.index_cast %172 : i32 to index
        %174 = memref.load %arg2[%173] : memref<64xi32, #tpu.memory_space<smem>>
        %175 = arith.addi %47, %171 : i32
        %176 = arith.index_cast %175 : i32 to index
        %177 = memref.load %arg3[%176] : memref<64xi32, #tpu.memory_space<smem>>
        %c0_i32_111 = arith.constant 0 : i32
        %c0_i32_112 = arith.constant 0 : i32
        %c0_i32_113 = arith.constant 0 : i32
        %c0_i32_114 = arith.constant 0 : i32
        %178 = tpu.memref_slice %arg5[%174, %c0_i32_114] : memref<50x128xf32, #tpu.memory_space<any>> -> memref<1x128xf32, #tpu.memory_space<any>>
        %c0_i32_115 = arith.constant 0 : i32
        %179 = tpu.memref_slice %arg8[%c0_i32_111, %171, %c0_i32_115] : memref<2x16x128xf32, #tpu.memory_space<vmem>> -> memref<1x1x128xf32, #tpu.memory_space<vmem>>
        %180 = tpu.memref_squeeze %179 : memref<1x1x128xf32, #tpu.memory_space<vmem>> -> memref<1x128xf32, #tpu.memory_space<vmem>>
        %181 = tpu.memref_slice %arg11[%c0_i32_112, %c0_i32_113] : memref<2x2x!tpu.dma_semaphore, #tpu.memory_space<semaphore_mem>> -> memref<1x1x!tpu.dma_semaphore, #tpu.memory_space<semaphore_mem>>
        %182 = tpu.memref_squeeze %181 : memref<1x1x!tpu.dma_semaphore, #tpu.memory_space<semaphore_mem>> -> memref<!tpu.dma_semaphore, #tpu.memory_space<semaphore_mem>>
        tpu.enqueue_dma source(%178 : memref<1x128xf32, #tpu.memory_space<any>>) target(%180 : memref<1x128xf32, #tpu.memory_space<vmem>>) target_semaphore(%182 : memref<!tpu.dma_semaphore, #tpu.memory_space<semaphore_mem>>)
        %c0_i32_116 = arith.constant 0 : i32
        %c0_i32_117 = arith.constant 0 : i32
        %c1_i32_118 = arith.constant 1 : i32
        %c0_i32_119 = arith.constant 0 : i32
        %183 = tpu.memref_slice %arg5[%177, %c0_i32_119] : memref<50x128xf32, #tpu.memory_space<any>> -> memref<1x128xf32, #tpu.memory_space<any>>
        %c0_i32_120 = arith.constant 0 : i32
        %184 = tpu.memref_slice %arg9[%c0_i32_116, %171, %c0_i32_120] : memref<2x16x128xf32, #tpu.memory_space<vmem>> -> memref<1x1x128xf32, #tpu.memory_space<vmem>>
        %185 = tpu.memref_squeeze %184 : memref<1x1x128xf32, #tpu.memory_space<vmem>> -> memref<1x128xf32, #tpu.memory_space<vmem>>
        %186 = tpu.memref_slice %arg11[%c0_i32_117, %c1_i32_118] : memref<2x2x!tpu.dma_semaphore, #tpu.memory_space<semaphore_mem>> -> memref<1x1x!tpu.dma_semaphore, #tpu.memory_space<semaphore_mem>>
        %187 = tpu.memref_squeeze %186 : memref<1x1x!tpu.dma_semaphore, #tpu.memory_space<semaphore_mem>> -> memref<!tpu.dma_semaphore, #tpu.memory_space<semaphore_mem>>
        tpu.enqueue_dma source(%183 : memref<1x128xf32, #tpu.memory_space<any>>) target(%185 : memref<1x128xf32, #tpu.memory_space<vmem>>) target_semaphore(%187 : memref<!tpu.dma_semaphore, #tpu.memory_space<semaphore_mem>>)
      }
      %c2_i32_35 = arith.constant 2 : i32
    } else {
    }
    %c1_i32 = arith.constant 1 : i32
    %3 = arith.addi %arg1, %c1_i32 : i32
    %c2_i32 = arith.constant 2 : i32
    %4 = arith.cmpi slt, %3, %c2_i32 : i32
    %5 = arith.extui %4 : i1 to i32
    %c0_i32_1 = arith.constant 0 : i32
    %6 = arith.cmpi ne, %5, %c0_i32_1 : i32
    scf.if %6 {
      %c2_i32_30 = arith.constant 2 : i32
      %46 = arith.muli %arg0, %c2_i32_30 : i32
      %47 = arith.addi %46, %arg1 : i32
      %c1_i32_31 = arith.constant 1 : i32
      %48 = arith.addi %47, %c1_i32_31 : i32
      %c1_i32_32 = arith.constant 1 : i32
      %49 = arith.addi %arg1, %c1_i32_32 : i32
      %c2_i32_33 = arith.constant 2 : i32
      %c0_i32_34 = arith.constant 0 : i32
      %50 = arith.cmpi eq, %c2_i32_33, %c0_i32_34 : i32
      %c1_i32_35 = arith.constant 1 : i32
      %51 = arith.select %50, %c1_i32_35, %c2_i32_33 : i32
      %52 = arith.remsi %49, %51 : i32
      %c0_i32_36 = arith.constant 0 : i32
      %53 = arith.cmpi ne, %52, %c0_i32_36 : i32
      %c0_i32_37 = arith.constant 0 : i32
      %54 = arith.cmpi slt, %52, %c0_i32_37 : i32
      %c0_i32_38 = arith.constant 0 : i32
      %55 = arith.cmpi slt, %51, %c0_i32_38 : i32
      %56 = arith.xori %54, %55 : i1
      %57 = arith.andi %56, %53 : i1
      %58 = arith.addi %52, %51 : i32
      %59 = arith.select %57, %58, %52 : i32
      %c16_i32_39 = arith.constant 16 : i32
      %60 = arith.muli %48, %c16_i32_39 : i32
      %c0_i32_40 = arith.constant 0 : i32
      %c2_i32_41 = arith.constant 2 : i32
      %61 = arith.addi %c0_i32_40, %c2_i32_41 : i32
      %c1_i32_42 = arith.constant 1 : i32
      scf.for %arg12 = %c0_i32_40 to %61 step %c1_i32_42  : i32 {
        %c1_i32_44 = arith.constant 1 : i32
        %62 = arith.muli %arg12, %c1_i32_44 : i32
        %c0_i32_45 = arith.constant 0 : i32
        %63 = arith.addi %c0_i32_45, %62 : i32
        %c8_i32 = arith.constant 8 : i32
        %64 = arith.muli %63, %c8_i32 : i32
        %c0_i32_46 = arith.constant 0 : i32
        %65 = arith.addi %64, %c0_i32_46 : i32
        %66 = arith.addi %60, %65 : i32
        %67 = arith.index_cast %66 : i32 to index
        %68 = memref.load %arg2[%67] : memref<64xi32, #tpu.memory_space<smem>>
        %69 = arith.addi %60, %65 : i32
        %70 = arith.index_cast %69 : i32 to index
        %71 = memref.load %arg3[%70] : memref<64xi32, #tpu.memory_space<smem>>
        %c0_i32_47 = arith.constant 0 : i32
        %c0_i32_48 = arith.constant 0 : i32
        %72 = tpu.memref_slice %arg5[%68, %c0_i32_48] : memref<50x128xf32, #tpu.memory_space<any>> -> memref<1x128xf32, #tpu.memory_space<any>>
        %c0_i32_49 = arith.constant 0 : i32
        %73 = tpu.memref_slice %arg8[%59, %65, %c0_i32_49] : memref<2x16x128xf32, #tpu.memory_space<vmem>> -> memref<1x1x128xf32, #tpu.memory_space<vmem>>
        %74 = tpu.memref_squeeze %73 : memref<1x1x128xf32, #tpu.memory_space<vmem>> -> memref<1x128xf32, #tpu.memory_space<vmem>>
        %75 = tpu.memref_slice %arg11[%59, %c0_i32_47] : memref<2x2x!tpu.dma_semaphore, #tpu.memory_space<semaphore_mem>> -> memref<1x1x!tpu.dma_semaphore, #tpu.memory_space<semaphore_mem>>
        %76 = tpu.memref_squeeze %75 : memref<1x1x!tpu.dma_semaphore, #tpu.memory_space<semaphore_mem>> -> memref<!tpu.dma_semaphore, #tpu.memory_space<semaphore_mem>>
        tpu.enqueue_dma source(%72 : memref<1x128xf32, #tpu.memory_space<any>>) target(%74 : memref<1x128xf32, #tpu.memory_space<vmem>>) target_semaphore(%76 : memref<!tpu.dma_semaphore, #tpu.memory_space<semaphore_mem>>)
        %c1_i32_50 = arith.constant 1 : i32
        %c0_i32_51 = arith.constant 0 : i32
        %77 = tpu.memref_slice %arg5[%71, %c0_i32_51] : memref<50x128xf32, #tpu.memory_space<any>> -> memref<1x128xf32, #tpu.memory_space<any>>
        %c0_i32_52 = arith.constant 0 : i32
        %78 = tpu.memref_slice %arg9[%59, %65, %c0_i32_52] : memref<2x16x128xf32, #tpu.memory_space<vmem>> -> memref<1x1x128xf32, #tpu.memory_space<vmem>>
        %79 = tpu.memref_squeeze %78 : memref<1x1x128xf32, #tpu.memory_space<vmem>> -> memref<1x128xf32, #tpu.memory_space<vmem>>
        %80 = tpu.memref_slice %arg11[%59, %c1_i32_50] : memref<2x2x!tpu.dma_semaphore, #tpu.memory_space<semaphore_mem>> -> memref<1x1x!tpu.dma_semaphore, #tpu.memory_space<semaphore_mem>>
        %81 = tpu.memref_squeeze %80 : memref<1x1x!tpu.dma_semaphore, #tpu.memory_space<semaphore_mem>> -> memref<!tpu.dma_semaphore, #tpu.memory_space<semaphore_mem>>
        tpu.enqueue_dma source(%77 : memref<1x128xf32, #tpu.memory_space<any>>) target(%79 : memref<1x128xf32, #tpu.memory_space<vmem>>) target_semaphore(%81 : memref<!tpu.dma_semaphore, #tpu.memory_space<semaphore_mem>>)
        %c1_i32_53 = arith.constant 1 : i32
        %82 = arith.addi %64, %c1_i32_53 : i32
        %83 = arith.addi %60, %82 : i32
        %84 = arith.index_cast %83 : i32 to index
        %85 = memref.load %arg2[%84] : memref<64xi32, #tpu.memory_space<smem>>
        %86 = arith.addi %60, %82 : i32
        %87 = arith.index_cast %86 : i32 to index
        %88 = memref.load %arg3[%87] : memref<64xi32, #tpu.memory_space<smem>>
        %c0_i32_54 = arith.constant 0 : i32
        %c0_i32_55 = arith.constant 0 : i32
        %89 = tpu.memref_slice %arg5[%85, %c0_i32_55] : memref<50x128xf32, #tpu.memory_space<any>> -> memref<1x128xf32, #tpu.memory_space<any>>
        %c0_i32_56 = arith.constant 0 : i32
        %90 = tpu.memref_slice %arg8[%59, %82, %c0_i32_56] : memref<2x16x128xf32, #tpu.memory_space<vmem>> -> memref<1x1x128xf32, #tpu.memory_space<vmem>>
        %91 = tpu.memref_squeeze %90 : memref<1x1x128xf32, #tpu.memory_space<vmem>> -> memref<1x128xf32, #tpu.memory_space<vmem>>
        %92 = tpu.memref_slice %arg11[%59, %c0_i32_54] : memref<2x2x!tpu.dma_semaphore, #tpu.memory_space<semaphore_mem>> -> memref<1x1x!tpu.dma_semaphore, #tpu.memory_space<semaphore_mem>>
        %93 = tpu.memref_squeeze %92 : memref<1x1x!tpu.dma_semaphore, #tpu.memory_space<semaphore_mem>> -> memref<!tpu.dma_semaphore, #tpu.memory_space<semaphore_mem>>
        tpu.enqueue_dma source(%89 : memref<1x128xf32, #tpu.memory_space<any>>) target(%91 : memref<1x128xf32, #tpu.memory_space<vmem>>) target_semaphore(%93 : memref<!tpu.dma_semaphore, #tpu.memory_space<semaphore_mem>>)
        %c1_i32_57 = arith.constant 1 : i32
        %c0_i32_58 = arith.constant 0 : i32
        %94 = tpu.memref_slice %arg5[%88, %c0_i32_58] : memref<50x128xf32, #tpu.memory_space<any>> -> memref<1x128xf32, #tpu.memory_space<any>>
        %c0_i32_59 = arith.constant 0 : i32
        %95 = tpu.memref_slice %arg9[%59, %82, %c0_i32_59] : memref<2x16x128xf32, #tpu.memory_space<vmem>> -> memref<1x1x128xf32, #tpu.memory_space<vmem>>
        %96 = tpu.memref_squeeze %95 : memref<1x1x128xf32, #tpu.memory_space<vmem>> -> memref<1x128xf32, #tpu.memory_space<vmem>>
        %97 = tpu.memref_slice %arg11[%59, %c1_i32_57] : memref<2x2x!tpu.dma_semaphore, #tpu.memory_space<semaphore_mem>> -> memref<1x1x!tpu.dma_semaphore, #tpu.memory_space<semaphore_mem>>
        %98 = tpu.memref_squeeze %97 : memref<1x1x!tpu.dma_semaphore, #tpu.memory_space<semaphore_mem>> -> memref<!tpu.dma_semaphore, #tpu.memory_space<semaphore_mem>>
        tpu.enqueue_dma source(%94 : memref<1x128xf32, #tpu.memory_space<any>>) target(%96 : memref<1x128xf32, #tpu.memory_space<vmem>>) target_semaphore(%98 : memref<!tpu.dma_semaphore, #tpu.memory_space<semaphore_mem>>)
        %c2_i32_60 = arith.constant 2 : i32
        %99 = arith.addi %64, %c2_i32_60 : i32
        %100 = arith.addi %60, %99 : i32
        %101 = arith.index_cast %100 : i32 to index
        %102 = memref.load %arg2[%101] : memref<64xi32, #tpu.memory_space<smem>>
        %103 = arith.addi %60, %99 : i32
        %104 = arith.index_cast %103 : i32 to index
        %105 = memref.load %arg3[%104] : memref<64xi32, #tpu.memory_space<smem>>
        %c0_i32_61 = arith.constant 0 : i32
        %c0_i32_62 = arith.constant 0 : i32
        %106 = tpu.memref_slice %arg5[%102, %c0_i32_62] : memref<50x128xf32, #tpu.memory_space<any>> -> memref<1x128xf32, #tpu.memory_space<any>>
        %c0_i32_63 = arith.constant 0 : i32
        %107 = tpu.memref_slice %arg8[%59, %99, %c0_i32_63] : memref<2x16x128xf32, #tpu.memory_space<vmem>> -> memref<1x1x128xf32, #tpu.memory_space<vmem>>
        %108 = tpu.memref_squeeze %107 : memref<1x1x128xf32, #tpu.memory_space<vmem>> -> memref<1x128xf32, #tpu.memory_space<vmem>>
        %109 = tpu.memref_slice %arg11[%59, %c0_i32_61] : memref<2x2x!tpu.dma_semaphore, #tpu.memory_space<semaphore_mem>> -> memref<1x1x!tpu.dma_semaphore, #tpu.memory_space<semaphore_mem>>
        %110 = tpu.memref_squeeze %109 : memref<1x1x!tpu.dma_semaphore, #tpu.memory_space<semaphore_mem>> -> memref<!tpu.dma_semaphore, #tpu.memory_space<semaphore_mem>>
        tpu.enqueue_dma source(%106 : memref<1x128xf32, #tpu.memory_space<any>>) target(%108 : memref<1x128xf32, #tpu.memory_space<vmem>>) target_semaphore(%110 : memref<!tpu.dma_semaphore, #tpu.memory_space<semaphore_mem>>)
        %c1_i32_64 = arith.constant 1 : i32
        %c0_i32_65 = arith.constant 0 : i32
        %111 = tpu.memref_slice %arg5[%105, %c0_i32_65] : memref<50x128xf32, #tpu.memory_space<any>> -> memref<1x128xf32, #tpu.memory_space<any>>
        %c0_i32_66 = arith.constant 0 : i32
        %112 = tpu.memref_slice %arg9[%59, %99, %c0_i32_66] : memref<2x16x128xf32, #tpu.memory_space<vmem>> -> memref<1x1x128xf32, #tpu.memory_space<vmem>>
        %113 = tpu.memref_squeeze %112 : memref<1x1x128xf32, #tpu.memory_space<vmem>> -> memref<1x128xf32, #tpu.memory_space<vmem>>
        %114 = tpu.memref_slice %arg11[%59, %c1_i32_64] : memref<2x2x!tpu.dma_semaphore, #tpu.memory_space<semaphore_mem>> -> memref<1x1x!tpu.dma_semaphore, #tpu.memory_space<semaphore_mem>>
        %115 = tpu.memref_squeeze %114 : memref<1x1x!tpu.dma_semaphore, #tpu.memory_space<semaphore_mem>> -> memref<!tpu.dma_semaphore, #tpu.memory_space<semaphore_mem>>
        tpu.enqueue_dma source(%111 : memref<1x128xf32, #tpu.memory_space<any>>) target(%113 : memref<1x128xf32, #tpu.memory_space<vmem>>) target_semaphore(%115 : memref<!tpu.dma_semaphore, #tpu.memory_space<semaphore_mem>>)
        %c3_i32 = arith.constant 3 : i32
        %116 = arith.addi %64, %c3_i32 : i32
        %117 = arith.addi %60, %116 : i32
        %118 = arith.index_cast %117 : i32 to index
        %119 = memref.load %arg2[%118] : memref<64xi32, #tpu.memory_space<smem>>
        %120 = arith.addi %60, %116 : i32
        %121 = arith.index_cast %120 : i32 to index
        %122 = memref.load %arg3[%121] : memref<64xi32, #tpu.memory_space<smem>>
        %c0_i32_67 = arith.constant 0 : i32
        %c0_i32_68 = arith.constant 0 : i32
        %123 = tpu.memref_slice %arg5[%119, %c0_i32_68] : memref<50x128xf32, #tpu.memory_space<any>> -> memref<1x128xf32, #tpu.memory_space<any>>
        %c0_i32_69 = arith.constant 0 : i32
        %124 = tpu.memref_slice %arg8[%59, %116, %c0_i32_69] : memref<2x16x128xf32, #tpu.memory_space<vmem>> -> memref<1x1x128xf32, #tpu.memory_space<vmem>>
        %125 = tpu.memref_squeeze %124 : memref<1x1x128xf32, #tpu.memory_space<vmem>> -> memref<1x128xf32, #tpu.memory_space<vmem>>
        %126 = tpu.memref_slice %arg11[%59, %c0_i32_67] : memref<2x2x!tpu.dma_semaphore, #tpu.memory_space<semaphore_mem>> -> memref<1x1x!tpu.dma_semaphore, #tpu.memory_space<semaphore_mem>>
        %127 = tpu.memref_squeeze %126 : memref<1x1x!tpu.dma_semaphore, #tpu.memory_space<semaphore_mem>> -> memref<!tpu.dma_semaphore, #tpu.memory_space<semaphore_mem>>
        tpu.enqueue_dma source(%123 : memref<1x128xf32, #tpu.memory_space<any>>) target(%125 : memref<1x128xf32, #tpu.memory_space<vmem>>) target_semaphore(%127 : memref<!tpu.dma_semaphore, #tpu.memory_space<semaphore_mem>>)
        %c1_i32_70 = arith.constant 1 : i32
        %c0_i32_71 = arith.constant 0 : i32
        %128 = tpu.memref_slice %arg5[%122, %c0_i32_71] : memref<50x128xf32, #tpu.memory_space<any>> -> memref<1x128xf32, #tpu.memory_space<any>>
        %c0_i32_72 = arith.constant 0 : i32
        %129 = tpu.memref_slice %arg9[%59, %116, %c0_i32_72] : memref<2x16x128xf32, #tpu.memory_space<vmem>> -> memref<1x1x128xf32, #tpu.memory_space<vmem>>
        %130 = tpu.memref_squeeze %129 : memref<1x1x128xf32, #tpu.memory_space<vmem>> -> memref<1x128xf32, #tpu.memory_space<vmem>>
        %131 = tpu.memref_slice %arg11[%59, %c1_i32_70] : memref<2x2x!tpu.dma_semaphore, #tpu.memory_space<semaphore_mem>> -> memref<1x1x!tpu.dma_semaphore, #tpu.memory_space<semaphore_mem>>
        %132 = tpu.memref_squeeze %131 : memref<1x1x!tpu.dma_semaphore, #tpu.memory_space<semaphore_mem>> -> memref<!tpu.dma_semaphore, #tpu.memory_space<semaphore_mem>>
        tpu.enqueue_dma source(%128 : memref<1x128xf32, #tpu.memory_space<any>>) target(%130 : memref<1x128xf32, #tpu.memory_space<vmem>>) target_semaphore(%132 : memref<!tpu.dma_semaphore, #tpu.memory_space<semaphore_mem>>)
        %c4_i32 = arith.constant 4 : i32
        %133 = arith.addi %64, %c4_i32 : i32
        %134 = arith.addi %60, %133 : i32
        %135 = arith.index_cast %134 : i32 to index
        %136 = memref.load %arg2[%135] : memref<64xi32, #tpu.memory_space<smem>>
        %137 = arith.addi %60, %133 : i32
        %138 = arith.index_cast %137 : i32 to index
        %139 = memref.load %arg3[%138] : memref<64xi32, #tpu.memory_space<smem>>
        %c0_i32_73 = arith.constant 0 : i32
        %c0_i32_74 = arith.constant 0 : i32
        %140 = tpu.memref_slice %arg5[%136, %c0_i32_74] : memref<50x128xf32, #tpu.memory_space<any>> -> memref<1x128xf32, #tpu.memory_space<any>>
        %c0_i32_75 = arith.constant 0 : i32
        %141 = tpu.memref_slice %arg8[%59, %133, %c0_i32_75] : memref<2x16x128xf32, #tpu.memory_space<vmem>> -> memref<1x1x128xf32, #tpu.memory_space<vmem>>
        %142 = tpu.memref_squeeze %141 : memref<1x1x128xf32, #tpu.memory_space<vmem>> -> memref<1x128xf32, #tpu.memory_space<vmem>>
        %143 = tpu.memref_slice %arg11[%59, %c0_i32_73] : memref<2x2x!tpu.dma_semaphore, #tpu.memory_space<semaphore_mem>> -> memref<1x1x!tpu.dma_semaphore, #tpu.memory_space<semaphore_mem>>
        %144 = tpu.memref_squeeze %143 : memref<1x1x!tpu.dma_semaphore, #tpu.memory_space<semaphore_mem>> -> memref<!tpu.dma_semaphore, #tpu.memory_space<semaphore_mem>>
        tpu.enqueue_dma source(%140 : memref<1x128xf32, #tpu.memory_space<any>>) target(%142 : memref<1x128xf32, #tpu.memory_space<vmem>>) target_semaphore(%144 : memref<!tpu.dma_semaphore, #tpu.memory_space<semaphore_mem>>)
        %c1_i32_76 = arith.constant 1 : i32
        %c0_i32_77 = arith.constant 0 : i32
        %145 = tpu.memref_slice %arg5[%139, %c0_i32_77] : memref<50x128xf32, #tpu.memory_space<any>> -> memref<1x128xf32, #tpu.memory_space<any>>
        %c0_i32_78 = arith.constant 0 : i32
        %146 = tpu.memref_slice %arg9[%59, %133, %c0_i32_78] : memref<2x16x128xf32, #tpu.memory_space<vmem>> -> memref<1x1x128xf32, #tpu.memory_space<vmem>>
        %147 = tpu.memref_squeeze %146 : memref<1x1x128xf32, #tpu.memory_space<vmem>> -> memref<1x128xf32, #tpu.memory_space<vmem>>
        %148 = tpu.memref_slice %arg11[%59, %c1_i32_76] : memref<2x2x!tpu.dma_semaphore, #tpu.memory_space<semaphore_mem>> -> memref<1x1x!tpu.dma_semaphore, #tpu.memory_space<semaphore_mem>>
        %149 = tpu.memref_squeeze %148 : memref<1x1x!tpu.dma_semaphore, #tpu.memory_space<semaphore_mem>> -> memref<!tpu.dma_semaphore, #tpu.memory_space<semaphore_mem>>
        tpu.enqueue_dma source(%145 : memref<1x128xf32, #tpu.memory_space<any>>) target(%147 : memref<1x128xf32, #tpu.memory_space<vmem>>) target_semaphore(%149 : memref<!tpu.dma_semaphore, #tpu.memory_space<semaphore_mem>>)
        %c5_i32 = arith.constant 5 : i32
        %150 = arith.addi %64, %c5_i32 : i32
        %151 = arith.addi %60, %150 : i32
        %152 = arith.index_cast %151 : i32 to index
        %153 = memref.load %arg2[%152] : memref<64xi32, #tpu.memory_space<smem>>
        %154 = arith.addi %60, %150 : i32
        %155 = arith.index_cast %154 : i32 to index
        %156 = memref.load %arg3[%155] : memref<64xi32, #tpu.memory_space<smem>>
        %c0_i32_79 = arith.constant 0 : i32
        %c0_i32_80 = arith.constant 0 : i32
        %157 = tpu.memref_slice %arg5[%153, %c0_i32_80] : memref<50x128xf32, #tpu.memory_space<any>> -> memref<1x128xf32, #tpu.memory_space<any>>
        %c0_i32_81 = arith.constant 0 : i32
        %158 = tpu.memref_slice %arg8[%59, %150, %c0_i32_81] : memref<2x16x128xf32, #tpu.memory_space<vmem>> -> memref<1x1x128xf32, #tpu.memory_space<vmem>>
        %159 = tpu.memref_squeeze %158 : memref<1x1x128xf32, #tpu.memory_space<vmem>> -> memref<1x128xf32, #tpu.memory_space<vmem>>
        %160 = tpu.memref_slice %arg11[%59, %c0_i32_79] : memref<2x2x!tpu.dma_semaphore, #tpu.memory_space<semaphore_mem>> -> memref<1x1x!tpu.dma_semaphore, #tpu.memory_space<semaphore_mem>>
        %161 = tpu.memref_squeeze %160 : memref<1x1x!tpu.dma_semaphore, #tpu.memory_space<semaphore_mem>> -> memref<!tpu.dma_semaphore, #tpu.memory_space<semaphore_mem>>
        tpu.enqueue_dma source(%157 : memref<1x128xf32, #tpu.memory_space<any>>) target(%159 : memref<1x128xf32, #tpu.memory_space<vmem>>) target_semaphore(%161 : memref<!tpu.dma_semaphore, #tpu.memory_space<semaphore_mem>>)
        %c1_i32_82 = arith.constant 1 : i32
        %c0_i32_83 = arith.constant 0 : i32
        %162 = tpu.memref_slice %arg5[%156, %c0_i32_83] : memref<50x128xf32, #tpu.memory_space<any>> -> memref<1x128xf32, #tpu.memory_space<any>>
        %c0_i32_84 = arith.constant 0 : i32
        %163 = tpu.memref_slice %arg9[%59, %150, %c0_i32_84] : memref<2x16x128xf32, #tpu.memory_space<vmem>> -> memref<1x1x128xf32, #tpu.memory_space<vmem>>
        %164 = tpu.memref_squeeze %163 : memref<1x1x128xf32, #tpu.memory_space<vmem>> -> memref<1x128xf32, #tpu.memory_space<vmem>>
        %165 = tpu.memref_slice %arg11[%59, %c1_i32_82] : memref<2x2x!tpu.dma_semaphore, #tpu.memory_space<semaphore_mem>> -> memref<1x1x!tpu.dma_semaphore, #tpu.memory_space<semaphore_mem>>
        %166 = tpu.memref_squeeze %165 : memref<1x1x!tpu.dma_semaphore, #tpu.memory_space<semaphore_mem>> -> memref<!tpu.dma_semaphore, #tpu.memory_space<semaphore_mem>>
        tpu.enqueue_dma source(%162 : memref<1x128xf32, #tpu.memory_space<any>>) target(%164 : memref<1x128xf32, #tpu.memory_space<vmem>>) target_semaphore(%166 : memref<!tpu.dma_semaphore, #tpu.memory_space<semaphore_mem>>)
        %c6_i32 = arith.constant 6 : i32
        %167 = arith.addi %64, %c6_i32 : i32
        %168 = arith.addi %60, %167 : i32
        %169 = arith.index_cast %168 : i32 to index
        %170 = memref.load %arg2[%169] : memref<64xi32, #tpu.memory_space<smem>>
        %171 = arith.addi %60, %167 : i32
        %172 = arith.index_cast %171 : i32 to index
        %173 = memref.load %arg3[%172] : memref<64xi32, #tpu.memory_space<smem>>
        %c0_i32_85 = arith.constant 0 : i32
        %c0_i32_86 = arith.constant 0 : i32
        %174 = tpu.memref_slice %arg5[%170, %c0_i32_86] : memref<50x128xf32, #tpu.memory_space<any>> -> memref<1x128xf32, #tpu.memory_space<any>>
        %c0_i32_87 = arith.constant 0 : i32
        %175 = tpu.memref_slice %arg8[%59, %167, %c0_i32_87] : memref<2x16x128xf32, #tpu.memory_space<vmem>> -> memref<1x1x128xf32, #tpu.memory_space<vmem>>
        %176 = tpu.memref_squeeze %175 : memref<1x1x128xf32, #tpu.memory_space<vmem>> -> memref<1x128xf32, #tpu.memory_space<vmem>>
        %177 = tpu.memref_slice %arg11[%59, %c0_i32_85] : memref<2x2x!tpu.dma_semaphore, #tpu.memory_space<semaphore_mem>> -> memref<1x1x!tpu.dma_semaphore, #tpu.memory_space<semaphore_mem>>
        %178 = tpu.memref_squeeze %177 : memref<1x1x!tpu.dma_semaphore, #tpu.memory_space<semaphore_mem>> -> memref<!tpu.dma_semaphore, #tpu.memory_space<semaphore_mem>>
        tpu.enqueue_dma source(%174 : memref<1x128xf32, #tpu.memory_space<any>>) target(%176 : memref<1x128xf32, #tpu.memory_space<vmem>>) target_semaphore(%178 : memref<!tpu.dma_semaphore, #tpu.memory_space<semaphore_mem>>)
        %c1_i32_88 = arith.constant 1 : i32
        %c0_i32_89 = arith.constant 0 : i32
        %179 = tpu.memref_slice %arg5[%173, %c0_i32_89] : memref<50x128xf32, #tpu.memory_space<any>> -> memref<1x128xf32, #tpu.memory_space<any>>
        %c0_i32_90 = arith.constant 0 : i32
        %180 = tpu.memref_slice %arg9[%59, %167, %c0_i32_90] : memref<2x16x128xf32, #tpu.memory_space<vmem>> -> memref<1x1x128xf32, #tpu.memory_space<vmem>>
        %181 = tpu.memref_squeeze %180 : memref<1x1x128xf32, #tpu.memory_space<vmem>> -> memref<1x128xf32, #tpu.memory_space<vmem>>
        %182 = tpu.memref_slice %arg11[%59, %c1_i32_88] : memref<2x2x!tpu.dma_semaphore, #tpu.memory_space<semaphore_mem>> -> memref<1x1x!tpu.dma_semaphore, #tpu.memory_space<semaphore_mem>>
        %183 = tpu.memref_squeeze %182 : memref<1x1x!tpu.dma_semaphore, #tpu.memory_space<semaphore_mem>> -> memref<!tpu.dma_semaphore, #tpu.memory_space<semaphore_mem>>
        tpu.enqueue_dma source(%179 : memref<1x128xf32, #tpu.memory_space<any>>) target(%181 : memref<1x128xf32, #tpu.memory_space<vmem>>) target_semaphore(%183 : memref<!tpu.dma_semaphore, #tpu.memory_space<semaphore_mem>>)
        %c7_i32 = arith.constant 7 : i32
        %184 = arith.addi %64, %c7_i32 : i32
        %185 = arith.addi %60, %184 : i32
        %186 = arith.index_cast %185 : i32 to index
        %187 = memref.load %arg2[%186] : memref<64xi32, #tpu.memory_space<smem>>
        %188 = arith.addi %60, %184 : i32
        %189 = arith.index_cast %188 : i32 to index
        %190 = memref.load %arg3[%189] : memref<64xi32, #tpu.memory_space<smem>>
        %c0_i32_91 = arith.constant 0 : i32
        %c0_i32_92 = arith.constant 0 : i32
        %191 = tpu.memref_slice %arg5[%187, %c0_i32_92] : memref<50x128xf32, #tpu.memory_space<any>> -> memref<1x128xf32, #tpu.memory_space<any>>
        %c0_i32_93 = arith.constant 0 : i32
        %192 = tpu.memref_slice %arg8[%59, %184, %c0_i32_93] : memref<2x16x128xf32, #tpu.memory_space<vmem>> -> memref<1x1x128xf32, #tpu.memory_space<vmem>>
        %193 = tpu.memref_squeeze %192 : memref<1x1x128xf32, #tpu.memory_space<vmem>> -> memref<1x128xf32, #tpu.memory_space<vmem>>
        %194 = tpu.memref_slice %arg11[%59, %c0_i32_91] : memref<2x2x!tpu.dma_semaphore, #tpu.memory_space<semaphore_mem>> -> memref<1x1x!tpu.dma_semaphore, #tpu.memory_space<semaphore_mem>>
        %195 = tpu.memref_squeeze %194 : memref<1x1x!tpu.dma_semaphore, #tpu.memory_space<semaphore_mem>> -> memref<!tpu.dma_semaphore, #tpu.memory_space<semaphore_mem>>
        tpu.enqueue_dma source(%191 : memref<1x128xf32, #tpu.memory_space<any>>) target(%193 : memref<1x128xf32, #tpu.memory_space<vmem>>) target_semaphore(%195 : memref<!tpu.dma_semaphore, #tpu.memory_space<semaphore_mem>>)
        %c1_i32_94 = arith.constant 1 : i32
        %c0_i32_95 = arith.constant 0 : i32
        %196 = tpu.memref_slice %arg5[%190, %c0_i32_95] : memref<50x128xf32, #tpu.memory_space<any>> -> memref<1x128xf32, #tpu.memory_space<any>>
        %c0_i32_96 = arith.constant 0 : i32
        %197 = tpu.memref_slice %arg9[%59, %184, %c0_i32_96] : memref<2x16x128xf32, #tpu.memory_space<vmem>> -> memref<1x1x128xf32, #tpu.memory_space<vmem>>
        %198 = tpu.memref_squeeze %197 : memref<1x1x128xf32, #tpu.memory_space<vmem>> -> memref<1x128xf32, #tpu.memory_space<vmem>>
        %199 = tpu.memref_slice %arg11[%59, %c1_i32_94] : memref<2x2x!tpu.dma_semaphore, #tpu.memory_space<semaphore_mem>> -> memref<1x1x!tpu.dma_semaphore, #tpu.memory_space<semaphore_mem>>
        %200 = tpu.memref_squeeze %199 : memref<1x1x!tpu.dma_semaphore, #tpu.memory_space<semaphore_mem>> -> memref<!tpu.dma_semaphore, #tpu.memory_space<semaphore_mem>>
        tpu.enqueue_dma source(%196 : memref<1x128xf32, #tpu.memory_space<any>>) target(%198 : memref<1x128xf32, #tpu.memory_space<vmem>>) target_semaphore(%200 : memref<!tpu.dma_semaphore, #tpu.memory_space<semaphore_mem>>)
      }
      %c2_i32_43 = arith.constant 2 : i32
    } else {
    }
    %c2_i32_2 = arith.constant 2 : i32
    %7 = arith.muli %arg0, %c2_i32_2 : i32
    %8 = arith.addi %7, %arg1 : i32
    %c16_i32 = arith.constant 16 : i32
    %9 = arith.muli %8, %c16_i32 : i32
    %c0_i32_3 = arith.constant 0 : i32
    %c2_i32_4 = arith.constant 2 : i32
    %10 = arith.addi %c0_i32_3, %c2_i32_4 : i32
    %c1_i32_5 = arith.constant 1 : i32
    scf.for %arg12 = %c0_i32_3 to %10 step %c1_i32_5  : i32 {
      %c1_i32_30 = arith.constant 1 : i32
      %46 = arith.muli %arg12, %c1_i32_30 : i32
      %c0_i32_31 = arith.constant 0 : i32
      %47 = arith.addi %c0_i32_31, %46 : i32
      %c8_i32 = arith.constant 8 : i32
      %48 = arith.muli %47, %c8_i32 : i32
      %c0_i32_32 = arith.constant 0 : i32
      %49 = arith.addi %48, %c0_i32_32 : i32
      %50 = arith.addi %9, %49 : i32
      %51 = arith.index_cast %50 : i32 to index
      %52 = memref.load %arg4[%51] : memref<64xi32, #tpu.memory_space<smem>>
      %53 = arith.index_cast %52 : i32 to index
      %c0_33 = arith.constant 0 : index
      %54 = vector.load %arg6[%53, %c0_33] : memref<12x128xf32, #tpu.memory_space<vmem>>, vector<1x128xf32>
      %55 = arith.index_cast %49 : i32 to index
      %c0_34 = arith.constant 0 : index
      %56 = vector.load %arg10[%55, %c0_34] : memref<16x128xf32, #tpu.memory_space<vmem>>, vector<1x128xf32>
      tpu.vector_store %arg10[%55, %c0_34], %54 {strides = array<i32>} : memref<16x128xf32, #tpu.memory_space<vmem>>, vector<1x128xf32>,
      %c1_i32_35 = arith.constant 1 : i32
      %57 = arith.addi %48, %c1_i32_35 : i32
      %58 = arith.addi %9, %57 : i32
      %59 = arith.index_cast %58 : i32 to index
      %60 = memref.load %arg4[%59] : memref<64xi32, #tpu.memory_space<smem>>
      %61 = arith.index_cast %60 : i32 to index
      %c0_36 = arith.constant 0 : index
      %62 = vector.load %arg6[%61, %c0_36] : memref<12x128xf32, #tpu.memory_space<vmem>>, vector<1x128xf32>
      %63 = arith.index_cast %57 : i32 to index
      %c0_37 = arith.constant 0 : index
      %64 = vector.load %arg10[%63, %c0_37] : memref<16x128xf32, #tpu.memory_space<vmem>>, vector<1x128xf32>
      tpu.vector_store %arg10[%63, %c0_37], %62 {strides = array<i32>} : memref<16x128xf32, #tpu.memory_space<vmem>>, vector<1x128xf32>,
      %c2_i32_38 = arith.constant 2 : i32
      %65 = arith.addi %48, %c2_i32_38 : i32
      %66 = arith.addi %9, %65 : i32
      %67 = arith.index_cast %66 : i32 to index
      %68 = memref.load %arg4[%67] : memref<64xi32, #tpu.memory_space<smem>>
      %69 = arith.index_cast %68 : i32 to index
      %c0_39 = arith.constant 0 : index
      %70 = vector.load %arg6[%69, %c0_39] : memref<12x128xf32, #tpu.memory_space<vmem>>, vector<1x128xf32>
      %71 = arith.index_cast %65 : i32 to index
      %c0_40 = arith.constant 0 : index
      %72 = vector.load %arg10[%71, %c0_40] : memref<16x128xf32, #tpu.memory_space<vmem>>, vector<1x128xf32>
      tpu.vector_store %arg10[%71, %c0_40], %70 {strides = array<i32>} : memref<16x128xf32, #tpu.memory_space<vmem>>, vector<1x128xf32>,
      %c3_i32 = arith.constant 3 : i32
      %73 = arith.addi %48, %c3_i32 : i32
      %74 = arith.addi %9, %73 : i32
      %75 = arith.index_cast %74 : i32 to index
      %76 = memref.load %arg4[%75] : memref<64xi32, #tpu.memory_space<smem>>
      %77 = arith.index_cast %76 : i32 to index
      %c0_41 = arith.constant 0 : index
      %78 = vector.load %arg6[%77, %c0_41] : memref<12x128xf32, #tpu.memory_space<vmem>>, vector<1x128xf32>
      %79 = arith.index_cast %73 : i32 to index
      %c0_42 = arith.constant 0 : index
      %80 = vector.load %arg10[%79, %c0_42] : memref<16x128xf32, #tpu.memory_space<vmem>>, vector<1x128xf32>
      tpu.vector_store %arg10[%79, %c0_42], %78 {strides = array<i32>} : memref<16x128xf32, #tpu.memory_space<vmem>>, vector<1x128xf32>,
      %c4_i32 = arith.constant 4 : i32
      %81 = arith.addi %48, %c4_i32 : i32
      %82 = arith.addi %9, %81 : i32
      %83 = arith.index_cast %82 : i32 to index
      %84 = memref.load %arg4[%83] : memref<64xi32, #tpu.memory_space<smem>>
      %85 = arith.index_cast %84 : i32 to index
      %c0_43 = arith.constant 0 : index
      %86 = vector.load %arg6[%85, %c0_43] : memref<12x128xf32, #tpu.memory_space<vmem>>, vector<1x128xf32>
      %87 = arith.index_cast %81 : i32 to index
      %c0_44 = arith.constant 0 : index
      %88 = vector.load %arg10[%87, %c0_44] : memref<16x128xf32, #tpu.memory_space<vmem>>, vector<1x128xf32>
      tpu.vector_store %arg10[%87, %c0_44], %86 {strides = array<i32>} : memref<16x128xf32, #tpu.memory_space<vmem>>, vector<1x128xf32>,
      %c5_i32 = arith.constant 5 : i32
      %89 = arith.addi %48, %c5_i32 : i32
      %90 = arith.addi %9, %89 : i32
      %91 = arith.index_cast %90 : i32 to index
      %92 = memref.load %arg4[%91] : memref<64xi32, #tpu.memory_space<smem>>
      %93 = arith.index_cast %92 : i32 to index
      %c0_45 = arith.constant 0 : index
      %94 = vector.load %arg6[%93, %c0_45] : memref<12x128xf32, #tpu.memory_space<vmem>>, vector<1x128xf32>
      %95 = arith.index_cast %89 : i32 to index
      %c0_46 = arith.constant 0 : index
      %96 = vector.load %arg10[%95, %c0_46] : memref<16x128xf32, #tpu.memory_space<vmem>>, vector<1x128xf32>
      tpu.vector_store %arg10[%95, %c0_46], %94 {strides = array<i32>} : memref<16x128xf32, #tpu.memory_space<vmem>>, vector<1x128xf32>,
      %c6_i32 = arith.constant 6 : i32
      %97 = arith.addi %48, %c6_i32 : i32
      %98 = arith.addi %9, %97 : i32
      %99 = arith.index_cast %98 : i32 to index
      %100 = memref.load %arg4[%99] : memref<64xi32, #tpu.memory_space<smem>>
      %101 = arith.index_cast %100 : i32 to index
      %c0_47 = arith.constant 0 : index
      %102 = vector.load %arg6[%101, %c0_47] : memref<12x128xf32, #tpu.memory_space<vmem>>, vector<1x128xf32>
      %103 = arith.index_cast %97 : i32 to index
      %c0_48 = arith.constant 0 : index
      %104 = vector.load %arg10[%103, %c0_48] : memref<16x128xf32, #tpu.memory_space<vmem>>, vector<1x128xf32>
      tpu.vector_store %arg10[%103, %c0_48], %102 {strides = array<i32>} : memref<16x128xf32, #tpu.memory_space<vmem>>, vector<1x128xf32>,
      %c7_i32 = arith.constant 7 : i32
      %105 = arith.addi %48, %c7_i32 : i32
      %106 = arith.addi %9, %105 : i32
      %107 = arith.index_cast %106 : i32 to index
      %108 = memref.load %arg4[%107] : memref<64xi32, #tpu.memory_space<smem>>
      %109 = arith.index_cast %108 : i32 to index
      %c0_49 = arith.constant 0 : index
      %110 = vector.load %arg6[%109, %c0_49] : memref<12x128xf32, #tpu.memory_space<vmem>>, vector<1x128xf32>
      %111 = arith.index_cast %105 : i32 to index
      %c0_50 = arith.constant 0 : index
      %112 = vector.load %arg10[%111, %c0_50] : memref<16x128xf32, #tpu.memory_space<vmem>>, vector<1x128xf32>
      tpu.vector_store %arg10[%111, %c0_50], %110 {strides = array<i32>} : memref<16x128xf32, #tpu.memory_space<vmem>>, vector<1x128xf32>,
    }
    %c2_i32_6 = arith.constant 2 : i32
    %c2_i32_7 = arith.constant 2 : i32
    %c0_i32_8 = arith.constant 0 : i32
    %11 = arith.cmpi eq, %c2_i32_7, %c0_i32_8 : i32
    %c1_i32_9 = arith.constant 1 : i32
    %12 = arith.select %11, %c1_i32_9, %c2_i32_7 : i32
    %13 = arith.remsi %arg1, %12 : i32
    %c0_i32_10 = arith.constant 0 : i32
    %14 = arith.cmpi ne, %13, %c0_i32_10 : i32
    %c0_i32_11 = arith.constant 0 : i32
    %15 = arith.cmpi slt, %13, %c0_i32_11 : i32
    %c0_i32_12 = arith.constant 0 : i32
    %16 = arith.cmpi slt, %12, %c0_i32_12 : i32
    %17 = arith.xori %15, %16 : i1
    %18 = arith.andi %17, %14 : i1
    %19 = arith.addi %13, %12 : i32
    %20 = arith.select %18, %19, %13 : i32
    %c0_i32_13 = arith.constant 0 : i32
    %c0_i32_14 = arith.constant 0 : i32
    %c0_i32_15 = arith.constant 0 : i32
    %21 = tpu.memref_slice %arg8[%20, %c0_i32_14, %c0_i32_15] : memref<2x16x128xf32, #tpu.memory_space<vmem>> -> memref<1x16x128xf32, #tpu.memory_space<vmem>>
    %22 = tpu.memref_squeeze %21 : memref<1x16x128xf32, #tpu.memory_space<vmem>> -> memref<16x128xf32, #tpu.memory_space<vmem>>
    %c0_i32_16 = arith.constant 0 : i32
    %c0_i32_17 = arith.constant 0 : i32
    %23 = tpu.memref_slice %arg8[%20, %c0_i32_16, %c0_i32_17] : memref<2x16x128xf32, #tpu.memory_space<vmem>> -> memref<1x16x128xf32, #tpu.memory_space<vmem>>
    %24 = tpu.memref_squeeze %23 : memref<1x16x128xf32, #tpu.memory_space<vmem>> -> memref<16x128xf32, #tpu.memory_space<vmem>>
    %25 = tpu.memref_slice %arg11[%20, %c0_i32_13] : memref<2x2x!tpu.dma_semaphore, #tpu.memory_space<semaphore_mem>> -> memref<1x1x!tpu.dma_semaphore, #tpu.memory_space<semaphore_mem>>
    %26 = tpu.memref_squeeze %25 : memref<1x1x!tpu.dma_semaphore, #tpu.memory_space<semaphore_mem>> -> memref<!tpu.dma_semaphore, #tpu.memory_space<semaphore_mem>>
    tpu.wait_dma2 semaphore(%26 : memref<!tpu.dma_semaphore, #tpu.memory_space<semaphore_mem>>) src(%22 : memref<16x128xf32, #tpu.memory_space<vmem>>) dst(%24 : memref<16x128xf32, #tpu.memory_space<vmem>>)
    %c1_i32_18 = arith.constant 1 : i32
    %c0_i32_19 = arith.constant 0 : i32
    %c0_i32_20 = arith.constant 0 : i32
    %27 = tpu.memref_slice %arg9[%20, %c0_i32_19, %c0_i32_20] : memref<2x16x128xf32, #tpu.memory_space<vmem>> -> memref<1x16x128xf32, #tpu.memory_space<vmem>>
    %28 = tpu.memref_squeeze %27 : memref<1x16x128xf32, #tpu.memory_space<vmem>> -> memref<16x128xf32, #tpu.memory_space<vmem>>
    %c0_i32_21 = arith.constant 0 : i32
    %c0_i32_22 = arith.constant 0 : i32
    %29 = tpu.memref_slice %arg9[%20, %c0_i32_21, %c0_i32_22] : memref<2x16x128xf32, #tpu.memory_space<vmem>> -> memref<1x16x128xf32, #tpu.memory_space<vmem>>
    %30 = tpu.memref_squeeze %29 : memref<1x16x128xf32, #tpu.memory_space<vmem>> -> memref<16x128xf32, #tpu.memory_space<vmem>>
    %31 = tpu.memref_slice %arg11[%20, %c1_i32_18] : memref<2x2x!tpu.dma_semaphore, #tpu.memory_space<semaphore_mem>> -> memref<1x1x!tpu.dma_semaphore, #tpu.memory_space<semaphore_mem>>
    %32 = tpu.memref_squeeze %31 : memref<1x1x!tpu.dma_semaphore, #tpu.memory_space<semaphore_mem>> -> memref<!tpu.dma_semaphore, #tpu.memory_space<semaphore_mem>>
    tpu.wait_dma2 semaphore(%32 : memref<!tpu.dma_semaphore, #tpu.memory_space<semaphore_mem>>) src(%28 : memref<16x128xf32, #tpu.memory_space<vmem>>) dst(%30 : memref<16x128xf32, #tpu.memory_space<vmem>>)
    %33 = arith.index_cast %20 : i32 to index
    %c0 = arith.constant 0 : index
    %c0_23 = arith.constant 0 : index
    %34 = vector.load %arg8[%33, %c0, %c0_23] : memref<2x16x128xf32, #tpu.memory_space<vmem>>, vector<1x16x128xf32>
    %35 = vector.shape_cast %34 : vector<1x16x128xf32> to vector<16x128xf32>
    %36 = arith.index_cast %20 : i32 to index
    %c0_24 = arith.constant 0 : index
    %c0_25 = arith.constant 0 : index
    %37 = vector.load %arg9[%36, %c0_24, %c0_25] : memref<2x16x128xf32, #tpu.memory_space<vmem>>, vector<1x16x128xf32>
    %38 = vector.shape_cast %37 : vector<1x16x128xf32> to vector<16x128xf32>
    %c0_26 = arith.constant 0 : index
    %c0_27 = arith.constant 0 : index
    %39 = vector.load %arg10[%c0_26, %c0_27] : memref<16x128xf32, #tpu.memory_space<vmem>>, vector<16x128xf32>
    %40 = arith.addf %35, %39 : vector<16x128xf32>
    %41 = arith.subf %40, %38 : vector<16x128xf32>
    %42 = math.absf %41 : vector<16x128xf32>
    %cst = arith.constant dense<0.000000e+00> : vector<16xf32>
    %43 = vector.multi_reduction <add>, %42, %cst [1] : vector<16x128xf32> to vector<16xf32>
    %44 = vector.shape_cast %43 : vector<16xf32> to vector<16x1xf32>
    %c0_28 = arith.constant 0 : index
    %c0_29 = arith.constant 0 : index
    %45 = vector.load %arg7[%c0_28, %c0_29] : memref<16x1xf32, #tpu.memory_space<vmem>>, vector<16x1xf32>
    tpu.vector_store %arg7[%c0_28, %c0_29], %44 {strides = array<i32>} : memref<16x1xf32, #tpu.memory_space<vmem>>, vector<16x1xf32>,
    return
  }
  func.func @transform_1(%arg0: i32, %arg1: i32, %arg2: memref<64xi32, #tpu.memory_space<smem>>, %arg3: memref<64xi32, #tpu.memory_space<smem>>, %arg4: memref<64xi32, #tpu.memory_space<smem>>) -> (i32, i32) {
    %c0_i32 = arith.constant 0 : i32
    %c0_i32_0 = arith.constant 0 : i32
    %c0_i32_1 = arith.constant 0 : i32
    return %c0_i32, %c0_i32_0 : i32, i32
  }
  func.func @transform_2(%arg0: i32, %arg1: i32, %arg2: memref<64xi32, #tpu.memory_space<smem>>, %arg3: memref<64xi32, #tpu.memory_space<smem>>, %arg4: memref<64xi32, #tpu.memory_space<smem>>) -> (i32, i32) {
    %c2_i32 = arith.constant 2 : i32
    %0 = arith.muli %arg0, %c2_i32 : i32
    %1 = arith.addi %0, %arg1 : i32
    %c0_i32 = arith.constant 0 : i32
    %c0_i32_0 = arith.constant 0 : i32
    return %1, %c0_i32 : i32, i32
  }
}

</mosaic_0001>

<llo_original>
// kernel: transe_score.1
$region0: #{transe_score.1}
  #allocation0 [shape = 'u32[]', space=smem, size = 0x4, offset = 0x4, fixed_abs, tag = 'smem constant byte address 0x4 - core index']
  #allocation1 [shape = 'u32[144,128]{1,0:T(1,128)}', space=vmem, size = 0x12000, scoped, tag = 'internal scratch']
  #allocation2 [shape = 'f32[2,16,128]{2,1,0:T(8,128)}', space=vmem, size = 0x4000, scoped, tag = 'scratch operand']
  #allocation3 [shape = 'f32[2,16,128]{2,1,0:T(8,128)}', space=vmem, size = 0x4000, scoped, tag = 'scratch operand']
  #allocation4 [shape = 'f32[16,128]{1,0:T(8,128)}', space=vmem, size = 0x2000, scoped, tag = 'scratch operand']
  #allocation5 [shape = 's32[4]{0}', space=sflag, size = 0x10, scoped, tag = 'scratch operand']
  #allocation6 [shape = 's32[1]{0}', space=sflag, size = 0x4, scoped, tag = 'scoped memory for transe_score.1']
  #allocation7 [shape = 'u8[512]{0}', space=smem, size = 0x200, scoped, tag = 'prefetched SMEM operand 0']
  #allocation8 [shape = 'u8[512]{0}', space=smem, size = 0x200, scoped, tag = 'prefetched SMEM operand 1']
  #allocation9 [shape = 'u8[512]{0}', space=smem, size = 0x200, scoped, tag = 'prefetched SMEM operand 2']
  #allocation10 [shape = 's32[]', space=sflag, size = 0x4, offset = 0, fixed_abs, tag = 'sflag constant byte address 0x0 - dummy sync flag']
  #allocation11 [shape = 's32[]', space=sflag, size = 0x4, offset = 0, fixed_abs, tag = 'sflag constant byte address 0x0 - dummy sync flag']
  #allocation12 [shape = 'u32[]', space=smem, size = 0x4, offset = 0x44, fixed_abs, tag = 'smem constant byte address 0x44 - assertion arg 0']
  #allocation13 [shape = 'u32[]', space=smem, size = 0x4, offset = 0x48, fixed_abs, tag = 'smem constant byte address 0x48 - assertion arg 1']
  #allocation14 [shape = 's32[]', space=sflag, size = 0x4, offset = 0, fixed_abs, tag = 'sflag constant byte address 0x0 - dummy sync flag']
  #allocation15 [shape = 's32[]', space=sflag, size = 0x4, offset = 0, fixed_abs, tag = 'sflag constant byte address 0x0 - dummy sync flag']
  #allocation16 [shape = 's32[]', space=sflag, size = 0x4, offset = 0, fixed_abs, tag = 'sflag constant byte address 0x0 - dummy sync flag']
  #allocation17 [shape = 's32[]', space=sflag, size = 0x4, offset = 0, fixed_abs, tag = 'sflag constant byte address 0x0 - dummy sync flag']
  #allocation18 [shape = 's32[]', space=sflag, size = 0x4, offset = 0, fixed_abs, tag = 'sflag constant byte address 0x0 - dummy sync flag']
  #allocation19 [shape = 's32[]', space=sflag, size = 0x4, offset = 0, fixed_abs, tag = 'sflag constant byte address 0x0 - dummy sync flag']
  #allocation20 [shape = 's32[]', space=sflag, size = 0x4, offset = 0, fixed_abs, tag = 'sflag constant byte address 0x0 - dummy sync flag']
  #allocation21 [shape = 's32[]', space=sflag, size = 0x4, offset = 0, fixed_abs, tag = 'sflag constant byte address 0x0 - dummy sync flag']
  #allocation22 [shape = 's32[]', space=sflag, size = 0x4, offset = 0, fixed_abs, tag = 'sflag constant byte address 0x0 - dummy sync flag']
  #allocation23 [shape = 's32[]', space=sflag, size = 0x4, offset = 0, fixed_abs, tag = 'sflag constant byte address 0x0 - dummy sync flag']
  #allocation24 [shape = 's32[]', space=sflag, size = 0x4, offset = 0, fixed_abs, tag = 'sflag constant byte address 0x0 - dummy sync flag']
  #allocation25 [shape = 's32[]', space=sflag, size = 0x4, offset = 0, fixed_abs, tag = 'sflag constant byte address 0x0 - dummy sync flag']
  #allocation26 [shape = 's32[]', space=sflag, size = 0x4, offset = 0, fixed_abs, tag = 'sflag constant byte address 0x0 - dummy sync flag']
  #allocation27 [shape = 's32[]', space=sflag, size = 0x4, offset = 0, fixed_abs, tag = 'sflag constant byte address 0x0 - dummy sync flag']
  #allocation28 [shape = 's32[]', space=sflag, size = 0x4, offset = 0, fixed_abs, tag = 'sflag constant byte address 0x0 - dummy sync flag']
  #allocation29 [shape = 's32[]', space=sflag, size = 0x4, offset = 0, fixed_abs, tag = 'sflag constant byte address 0x0 - dummy sync flag']
  #allocation30 [shape = 's32[]', space=sflag, size = 0x4, offset = 0, fixed_abs, tag = 'sflag constant byte address 0x0 - dummy sync flag']
  #allocation31 [shape = 's32[]', space=sflag, size = 0x4, offset = 0, fixed_abs, tag = 'sflag constant byte address 0x0 - dummy sync flag']
  #allocation32 [shape = 's32[]', space=sflag, size = 0x4, offset = 0, fixed_abs, tag = 'sflag constant byte address 0x0 - dummy sync flag']
  #allocation33 [shape = 's32[]', space=sflag, size = 0x4, offset = 0, fixed_abs, tag = 'sflag constant byte address 0x0 - dummy sync flag']
  #allocation34 [shape = 's32[]', space=sflag, size = 0x4, offset = 0, fixed_abs, tag = 'sflag constant byte address 0x0 - dummy sync flag']
  #allocation35 [shape = 's32[]', space=sflag, size = 0x4, offset = 0, fixed_abs, tag = 'sflag constant byte address 0x0 - dummy sync flag']
  #allocation36 [shape = 's32[]', space=sflag, size = 0x4, offset = 0, fixed_abs, tag = 'sflag constant byte address 0x0 - dummy sync flag']
  #allocation37 [shape = 's32[]', space=sflag, size = 0x4, offset = 0, fixed_abs, tag = 'sflag constant byte address 0x0 - dummy sync flag']
  #allocation38 [shape = 's32[]', space=sflag, size = 0x4, offset = 0, fixed_abs, tag = 'sflag constant byte address 0x0 - dummy sync flag']
  #allocation39 [shape = 's32[]', space=sflag, size = 0x4, offset = 0, fixed_abs, tag = 'sflag constant byte address 0x0 - dummy sync flag']
  #allocation40 [shape = 's32[]', space=sflag, size = 0x4, offset = 0, fixed_abs, tag = 'sflag constant byte address 0x0 - dummy sync flag']
  #allocation41 [shape = 's32[]', space=sflag, size = 0x4, offset = 0, fixed_abs, tag = 'sflag constant byte address 0x0 - dummy sync flag']
  #allocation42 [shape = 's32[]', space=sflag, size = 0x4, offset = 0, fixed_abs, tag = 'sflag constant byte address 0x0 - dummy sync flag']
  #allocation43 [shape = 's32[]', space=sflag, size = 0x4, offset = 0, fixed_abs, tag = 'sflag constant byte address 0x0 - dummy sync flag']
  #allocation44 [shape = 's32[]', space=sflag, size = 0x4, offset = 0, fixed_abs, tag = 'sflag constant byte address 0x0 - dummy sync flag']
  #allocation45 [shape = 's32[]', space=sflag, size = 0x4, offset = 0, fixed_abs, tag = 'sflag constant byte address 0x0 - dummy sync flag']
  #allocation46 [shape = 's32[]', space=sflag, size = 0x4, offset = 0, fixed_abs, tag = 'sflag constant byte address 0x0 - dummy sync flag']
  #allocation47 [shape = 's32[]', space=sflag, size = 0x4, offset = 0, fixed_abs, tag = 'sflag constant byte address 0x0 - dummy sync flag']
  #allocation48 [shape = 's32[]', space=sflag, size = 0x4, offset = 0, fixed_abs, tag = 'sflag constant byte address 0x0 - dummy sync flag']
  #allocation49 [shape = 's32[]', space=sflag, size = 0x4, offset = 0, fixed_abs, tag = 'sflag constant byte address 0x0 - dummy sync flag']
  #allocation50 [shape = 's32[]', space=sflag, size = 0x4, offset = 0, fixed_abs, tag = 'sflag constant byte address 0x0 - dummy sync flag']
  #allocation51 [shape = 's32[]', space=sflag, size = 0x4, offset = 0, fixed_abs, tag = 'sflag constant byte address 0x0 - dummy sync flag']
  #allocation52 [shape = 's32[]', space=sflag, size = 0x4, offset = 0, fixed_abs, tag = 'sflag constant byte address 0x0 - dummy sync flag']
  #allocation53 [shape = 's32[]', space=sflag, size = 0x4, offset = 0, fixed_abs, tag = 'sflag constant byte address 0x0 - dummy sync flag']
  #allocation54 [shape = 's32[]', space=sflag, size = 0x4, offset = 0, fixed_abs, tag = 'sflag constant byte address 0x0 - dummy sync flag']
  #allocation55 [shape = 's32[]', space=sflag, size = 0x4, offset = 0, fixed_abs, tag = 'sflag constant byte address 0x0 - dummy sync flag']
  #allocation56 [shape = 's32[]', space=sflag, size = 0x4, offset = 0, fixed_abs, tag = 'sflag constant byte address 0x0 - dummy sync flag']
  #allocation57 [shape = 's32[]', space=sflag, size = 0x4, offset = 0, fixed_abs, tag = 'sflag constant byte address 0x0 - dummy sync flag']
  #allocation58 [shape = 's32[]', space=sflag, size = 0x4, offset = 0, fixed_abs, tag = 'sflag constant byte address 0x0 - dummy sync flag']
  #allocation59 [shape = 's32[]', space=sflag, size = 0x4, offset = 0, fixed_abs, tag = 'sflag constant byte address 0x0 - dummy sync flag']
  #allocation60 [shape = 's32[]', space=sflag, size = 0x4, offset = 0, fixed_abs, tag = 'sflag constant byte address 0x0 - dummy sync flag']
  #allocation61 [shape = 's32[]', space=sflag, size = 0x4, offset = 0, fixed_abs, tag = 'sflag constant byte address 0x0 - dummy sync flag']
  #allocation62 [shape = 's32[]', space=sflag, size = 0x4, offset = 0, fixed_abs, tag = 'sflag constant byte address 0x0 - dummy sync flag']
  #allocation63 [shape = 's32[]', space=sflag, size = 0x4, offset = 0, fixed_abs, tag = 'sflag constant byte address 0x0 - dummy sync flag']
  #allocation64 [shape = 's32[]', space=sflag, size = 0x4, offset = 0, fixed_abs, tag = 'sflag constant byte address 0x0 - dummy sync flag']
  #allocation65 [shape = 's32[]', space=sflag, size = 0x4, offset = 0, fixed_abs, tag = 'sflag constant byte address 0x0 - dummy sync flag']
  #allocation66 [shape = 's32[]', space=sflag, size = 0x4, offset = 0, fixed_abs, tag = 'sflag constant byte address 0x0 - dummy sync flag']
  #allocation67 [shape = 's32[]', space=sflag, size = 0x4, offset = 0, fixed_abs, tag = 'sflag constant byte address 0x0 - dummy sync flag']
  #allocation68 [shape = 's32[]', space=sflag, size = 0x4, offset = 0, fixed_abs, tag = 'sflag constant byte address 0x0 - dummy sync flag']
  #allocation69 [shape = 's32[]', space=sflag, size = 0x4, offset = 0, fixed_abs, tag = 'sflag constant byte address 0x0 - dummy sync flag']
  #allocation70 [shape = 's32[]', space=sflag, size = 0x4, offset = 0, fixed_abs, tag = 'sflag constant byte address 0x0 - dummy sync flag']
  #allocation71 [shape = 's32[]', space=sflag, size = 0x4, offset = 0, fixed_abs, tag = 'sflag constant byte address 0x0 - dummy sync flag']
  #allocation72 [shape = 's32[]', space=sflag, size = 0x4, offset = 0, fixed_abs, tag = 'sflag constant byte address 0x0 - dummy sync flag']
  #allocation73 [shape = 's32[]', space=sflag, size = 0x4, offset = 0, fixed_abs, tag = 'sflag constant byte address 0x0 - dummy sync flag']
  #allocation74 [shape = 's32[]', space=sflag, size = 0x4, offset = 0, fixed_abs, tag = 'sflag constant byte address 0x0 - dummy sync flag']
  #allocation75 [shape = 's32[]', space=sflag, size = 0x4, offset = 0, fixed_abs, tag = 'sflag constant byte address 0x0 - dummy sync flag']
  %s0 = inlined_call_operand.vmem [shape: s32[64], index: 0, kind: input, shape index: {}]
  %s1 = inlined_call_operand.vmem [shape: s32[64], index: 1, kind: input, shape index: {}]
  %s2 = inlined_call_operand.vmem [shape: s32[64], index: 2, kind: input, shape index: {}]
  %s3 = inlined_call_operand.hbm [shape: f32[50,128], index: 3, kind: input, shape index: {}]
  %s4 = inlined_call_operand.vmem [shape: f32[12,128], index: 4, kind: input, shape index: {}]
  %s5 = inlined_call_operand.vmem [shape: f32[64,1], index: 5, kind: output, shape index: {}]
  %s6 = sld [smem:[#allocation0]]
  $region194: #{transe_score.1} parent=0
    _
  %s8 = ssub.s32 1, %s6
  %s9 = scalar_select 0, %s8, %s6
  %s10 = sshll.u32 %s0, 4
  %s11 = int_to_ptr.vmem [resolvable:$true] %s10
  %13 = dma.vmem_to_smem %s11, 16, [#allocation7], [#allocation6]
  %s14 = sshll.u32 %s1, 4
  %s15 = int_to_ptr.vmem [resolvable:$true] %s14
  %17 = dma.vmem_to_smem %s15, 16, [#allocation8], [#allocation6]
  %s18 = sshll.u32 %s2, 4
  %s19 = int_to_ptr.vmem [resolvable:$true] %s18
  %21 = dma.vmem_to_smem %s19, 16, [#allocation9], [#allocation6]
  %22 = dma.done [#allocation6], 48
  %23 = sfence
  loop: start=0, step=1, limit=6
  $region2: #{transe_score.1} parent=0 // loop_pre_header
    _
  $region3: #{transe_score.1} parent=0 // loop_header
    %s25 = sphi 0, %s29
    %p26 = scmp.ge.s32.totalorder %s25, 6
    %s32 = sphi 0, %s44
    %s33 = sphi 0, %s40
    %s34 = sphi 0, %s32
    %s35 = sphi 0, %s33
    %s36 = sphi 0, %s34
    %s37 = sphi 0, %s35
    %s45 = sphi 0, %s45
    %s47 = sphi 0, %s45
    %s48 = sphi 0, %s47
    %s62 = sphi 0, %s48
    %s72 = sphi 0, %s74
    %s75 = sphi 0, %s72
    %s76 = sphi 0, %s75
    %s92 = sphi 0, %s76
  $region4: #{transe_score.1} parent=0 // loop_header_branch
    %28 = sbr.rel (%p26) target = $region8
  $region5: #{transe_score.1} parent=0 // loop_body
    %s30 = ssub.s32 %s25, 1
    %s31 = ssub.s32 %s25, 2
    %s38 = sadd.s32 1, %s33
    %p39 = scmp.ge.s32.totalorder %s38, 2
    %s40 = scalar_select %p39, 0, %s38
    %s41 = sadd.s32 1, %s32
    %s42 = scalar_select %p39, %s41, %s32
    %p43 = scmp.ge.s32.totalorder %s42, 2
    %s44 = scalar_select %p43, 0, %s42
    %s46 = sadd.s32 %s45, 1
    %p49 = scmp.eq.s32.totalorder %s25, 3
    %p50 = scmp.ne.s32.totalorder %s45, %s47
    %p51 = scmp.eq.s32.totalorder %s25, 0
    %p52 = por %p50, %p51
    %p53 = scmp.ne.s32.totalorder %s45, %s47
    %p54 = scmp.eq.s32.totalorder %s30, 3
    %p55 = por %p53, %p54
    %p56 = scmp.ne.s32.totalorder %s47, %s48
    %p57 = scmp.eq.s32.totalorder %s30, 0
    %p58 = por %p56, %p57
    %p59 = scmp.ne.s32.totalorder %s47, %s48
    %p60 = scmp.eq.s32.totalorder %s31, 3
    %p61 = por %p59, %p60
    %p63 = scmp.ne.s32.totalorder %s48, %s62
    %p64 = scmp.eq.s32.totalorder %s31, 0
    %p65 = por %p63, %p64
    %s66 = smul.u32 %s32, 2
    %s67 = sadd.s32 %s66, %s33
    %s68 = smul.u32 %s44, 2
    %s69 = sadd.s32 %s68, %s40
    %s70 = ssub.s32 %s67, %s69
    %p71 = scmp.eq.s32.totalorder %s70, 0
    %s73 = sadd.s32 %s72, 1
    %s74 = scalar_select %p71, %s72, %s73
    %p77 = pneg %p71
    %p78 = scmp.eq.s32.totalorder %s25, 3
    %p79 = por %p77, %p78
    %p80 = scmp.ne.s32.totalorder %s72, %s75
    %p81 = scmp.eq.s32.totalorder %s25, 0
    %p82 = por %p80, %p81
    %p83 = scmp.ne.s32.totalorder %s72, %s75
    %p84 = scmp.eq.s32.totalorder %s30, 3
    %p85 = por %p83, %p84
    %p86 = scmp.ne.s32.totalorder %s75, %s76
    %p87 = scmp.eq.s32.totalorder %s30, 0
    %p88 = por %p86, %p87
    %p89 = scmp.ne.s32.totalorder %s75, %s76
    %p90 = scmp.eq.s32.totalorder %s31, 3
    %p91 = por %p89, %p90
    %p93 = scmp.ne.s32.totalorder %s76, %s92
    %p94 = scmp.eq.s32.totalorder %s31, 0
    %p95 = por %p93, %p94
    %p96 = scmp.le.s32.totalorder 1, %s25
    %p97 = scmp.lt.s32.totalorder %s25, 5
    %p98 = pnand %p96, %p97
    %p99 = pneg %p98
    // Predicated region
    $region9: #{transe_score.1} parent=5 // pred_check
      _
    $region10: #{transe_score.1} parent=5 // pred_check_branch
      %101 = sbr.rel (%p98) target = $region12
    $region11: #{transe_score.1} parent=5 // pred_region
      %s102 = ssub.s32 %s25, 1
      // Predicated region
      $region13: #{transe_score.1} parent=11 // pred_check
        %p103 = pneg %p58
      $region14: #{transe_score.1} parent=11 // pred_check_branch
        %105 = sbr.rel (%p103) target = $region16
      $region15: #{transe_score.1} parent=11 // pred_region
        _
      $region16: #{transe_score.1} parent=11 // pred_fallthru
        _
    $region12: #{transe_score.1} parent=5 // pred_fallthru
      _
    %p106 = scmp.lt.s32.totalorder %s25, 4
    // Predicated region
    $region17: #{transe_score.1} parent=5 // pred_check
      %p107 = pneg %p106
    $region18: #{transe_score.1} parent=5 // pred_check_branch
      %109 = sbr.rel (%p107) target = $region20
    $region19: #{transe_score.1} parent=5 // pred_region
      _
    $region20: #{transe_score.1} parent=5 // pred_fallthru
      _
    %p110 = scmp.le.s32.totalorder 1, %s25
    %p111 = scmp.lt.s32.totalorder %s25, 5
    %p112 = pnand %p110, %p111
    %p113 = pneg %p112
    // Predicated region
    $region21: #{transe_score.1} parent=5 // pred_check
      _
    $region22: #{transe_score.1} parent=5 // pred_check_branch
      %115 = sbr.rel (%p112) target = $region24
    $region23: #{transe_score.1} parent=5 // pred_region
      %s116 = ssub.s32 %s25, 1
      %p117 = pneg %p58
      %p118 = pneg %p55
      %p119 = pneg %p88
      %p120 = pneg %p85
      %s121 = smul.u32 %s34, 2
      %s122 = sadd.s32 %s121, %s35
      %s123 = smul.u32 2, %s122
      %p124 = scmp.lt.s32.totalorder %s123, 7
      %s125 = scalar_select %p124, %s123, 7
      %s126 = smul.addr %s125, 8
      %s127 = scalar_lea.vmem %s5, %s126
      %s128 = smul.u32 %s34, 2
      %s129 = sadd.s32 %s128, %s35
      %s130 = smul.u32 2, %s129
      %p131 = scmp.lt.s32.totalorder %s130, 7
      %s132 = scalar_select %p131, %s130, 7
      %s133 = smul.addr %s132, 8
      %s134 = scalar_lea.vmem %s5, %s133
      %s135 = smul.u32 %s34, 2
      %s136 = sadd.s32 %s135, %s35
      %s137 = smul.u32 2, %s136
      %p138 = scmp.eq.s32.totalorder %s35, 0
      // Predicated region
      $region25: #{transe_score.1} parent=23 // pred_check
        %p139 = pneg %p138
      $region26: #{transe_score.1} parent=23 // pred_check_branch
        %141 = sbr.rel (%p139) target = $region28
      $region27: #{transe_score.1} parent=23 // pred_region
        %s142 = smul.u32 %s34, 32
        loop: start=0, step=1, limit=2
        $region29: #{transe_score.1} parent=27 // loop_pre_header
          _
        $region30: #{transe_score.1} parent=27 // loop_header
          %s144 = sphi 0, %s148
          %p145 = scmp.ge.s32.totalorder %s144, 2
        $region31: #{transe_score.1} parent=27 // loop_header_branch
          %147 = sbr.rel (%p145) target = $region35
        $region32: #{transe_score.1} parent=27 // loop_body
          %s149 = smul.u32 %s144, 8
          %s150 = sadd.s32 %s142, %s149
          %s151 = sld [smem:[#allocation7 + %s150]]
          %s152 = sld [smem:[#allocation8 + %s150]]
          %s153 = smul.addr %s151, 16
          %s154 = scalar_lea.hbm %s3, %s153
          %s155 = scalar_lea.vmem [#allocation2], %s149
          // Predicated region
          $region36: #{transe_score.1} parent=32 // pred_check
            _
          $region37: #{transe_score.1} parent=32 // pred_check_branch
            %157 = sbr.rel target = $region39
          $region38: #{transe_score.1} parent=32 // pred_region
            %158 = sst [smem:[#allocation12]] [#allocation11]
            %159 = sst [smem:[#allocation13]] [#allocation10]
          $region39: #{transe_score.1} parent=32 // pred_fallthru
            _
          %161 = shalt.err (0)
          %s163 = sshll.u32 %s155, 4
          %s164 = int_to_ptr.vmem [resolvable:$true] %s163
          %166 = dma.hbm_to_vmem [thread:$0]  %s154, 16, %s164, [#allocation5]
          %s167 = smul.addr %s152, 16
          %s168 = scalar_lea.hbm %s3, %s167
          %s169 = scalar_lea.vmem [#allocation3], %s149
          %s170 = scalar_lea.sflag [#allocation5], 1
          // Predicated region
          $region40: #{transe_score.1} parent=32 // pred_check
            _
          $region41: #{transe_score.1} parent=32 // pred_check_branch
            %172 = sbr.rel target = $region43
          $region42: #{transe_score.1} parent=32 // pred_region
            %173 = sst [smem:[#allocation12]] [#allocation15]
            %174 = sst [smem:[#allocation13]] [#allocation14]
          $region43: #{transe_score.1} parent=32 // pred_fallthru
            _
          %176 = shalt.err (0)
          %s178 = sshll.u32 %s169, 4
          %s179 = int_to_ptr.vmem [resolvable:$true] %s178
          %181 = dma.hbm_to_vmem [thread:$0]  %s168, 16, %s179, %s170
          %s182 = sadd.s32 %s149, 1
          %s183 = sadd.s32 %s142, %s182
          %s184 = sld [smem:[#allocation7 + %s183]]
          %s185 = sld [smem:[#allocation8 + %s183]]
          %s186 = smul.addr %s184, 16
          %s187 = scalar_lea.hbm %s3, %s186
          %s188 = scalar_lea.vmem [#allocation2], %s182
          // Predicated region
          $region44: #{transe_score.1} parent=32 // pred_check
            _
          $region45: #{transe_score.1} parent=32 // pred_check_branch
            %190 = sbr.rel target = $region47
          $region46: #{transe_score.1} parent=32 // pred_region
            %191 = sst [smem:[#allocation12]] [#allocation17]
            %192 = sst [smem:[#allocation13]] [#allocation16]
          $region47: #{transe_score.1} parent=32 // pred_fallthru
            _
          %194 = shalt.err (0)
          %s196 = sshll.u32 %s188, 4
          %s197 = int_to_ptr.vmem [resolvable:$true] %s196
          %199 = dma.hbm_to_vmem [thread:$0]  %s187, 16, %s197, [#allocation5]
          %s200 = smul.addr %s185, 16
          %s201 = scalar_lea.hbm %s3, %s200
          %s202 = scalar_lea.vmem [#allocation3], %s182
          // Predicated region
          $region48: #{transe_score.1} parent=32 // pred_check
            _
          $region49: #{transe_score.1} parent=32 // pred_check_branch
            %204 = sbr.rel target = $region51
          $region50: #{transe_score.1} parent=32 // pred_region
            %205 = sst [smem:[#allocation12]] [#allocation19]
            %206 = sst [smem:[#allocation13]] [#allocation18]
          $region51: #{transe_score.1} parent=32 // pred_fallthru
            _
          %208 = shalt.err (0)
          %s210 = sshll.u32 %s202, 4
          %s211 = int_to_ptr.vmem [resolvable:$true] %s210
          %213 = dma.hbm_to_vmem [thread:$0]  %s201, 16, %s211, %s170
          %s214 = sadd.s32 %s149, 2
          %s215 = sadd.s32 %s142, %s214
          %s216 = sld [smem:[#allocation7 + %s215]]
          %s217 = sld [smem:[#allocation8 + %s215]]
          %s218 = smul.addr %s216, 16
          %s219 = scalar_lea.hbm %s3, %s218
          %s220 = scalar_lea.vmem [#allocation2], %s214
          // Predicated region
          $region52: #{transe_score.1} parent=32 // pred_check
            _
          $region53: #{transe_score.1} parent=32 // pred_check_branch
            %222 = sbr.rel target = $region55
          $region54: #{transe_score.1} parent=32 // pred_region
            %223 = sst [smem:[#allocation12]] [#allocation21]
            %224 = sst [smem:[#allocation13]] [#allocation20]
          $region55: #{transe_score.1} parent=32 // pred_fallthru
            _
          %226 = shalt.err (0)
          %s228 = sshll.u32 %s220, 4
          %s229 = int_to_ptr.vmem [resolvable:$true] %s228
          %231 = dma.hbm_to_vmem [thread:$0]  %s219, 16, %s229, [#allocation5]
          %s232 = smul.addr %s217, 16
          %s233 = scalar_lea.hbm %s3, %s232
          %s234 = scalar_lea.vmem [#allocation3], %s214
          // Predicated region
          $region56: #{transe_score.1} parent=32 // pred_check
            _
          $region57: #{transe_score.1} parent=32 // pred_check_branch
            %236 = sbr.rel target = $region59
          $region58: #{transe_score.1} parent=32 // pred_region
            %237 = sst [smem:[#allocation12]] [#allocation23]
            %238 = sst [smem:[#allocation13]] [#allocation22]
          $region59: #{transe_score.1} parent=32 // pred_fallthru
            _
          %240 = shalt.err (0)
          %s242 = sshll.u32 %s234, 4
          %s243 = int_to_ptr.vmem [resolvable:$true] %s242
          %245 = dma.hbm_to_vmem [thread:$0]  %s233, 16, %s243, %s170
          %s246 = sadd.s32 %s149, 3
          %s247 = sadd.s32 %s142, %s246
          %s248 = sld [smem:[#allocation7 + %s247]]
          %s249 = sld [smem:[#allocation8 + %s247]]
          %s250 = smul.addr %s248, 16
          %s251 = scalar_lea.hbm %s3, %s250
          %s252 = scalar_lea.vmem [#allocation2], %s246
          // Predicated region
          $region60: #{transe_score.1} parent=32 // pred_check
            _
          $region61: #{transe_score.1} parent=32 // pred_check_branch
            %254 = sbr.rel target = $region63
          $region62: #{transe_score.1} parent=32 // pred_region
            %255 = sst [smem:[#allocation12]] [#allocation25]
            %256 = sst [smem:[#allocation13]] [#allocation24]
          $region63: #{transe_score.1} parent=32 // pred_fallthru
            _
          %258 = shalt.err (0)
          %s260 = sshll.u32 %s252, 4
          %s261 = int_to_ptr.vmem [resolvable:$true] %s260
          %263 = dma.hbm_to_vmem [thread:$0]  %s251, 16, %s261, [#allocation5]
          %s264 = smul.addr %s249, 16
          %s265 = scalar_lea.hbm %s3, %s264
          %s266 = scalar_lea.vmem [#allocation3], %s246
          // Predicated region
          $region64: #{transe_score.1} parent=32 // pred_check
            _
          $region65: #{transe_score.1} parent=32 // pred_check_branch
            %268 = sbr.rel target = $region67
          $region66: #{transe_score.1} parent=32 // pred_region
            %269 = sst [smem:[#allocation12]] [#allocation27]
            %270 = sst [smem:[#allocation13]] [#allocation26]
          $region67: #{transe_score.1} parent=32 // pred_fallthru
            _
          %272 = shalt.err (0)
          %s274 = sshll.u32 %s266, 4
          %s275 = int_to_ptr.vmem [resolvable:$true] %s274
          %277 = dma.hbm_to_vmem [thread:$0]  %s265, 16, %s275, %s170
          %s278 = sadd.s32 %s149, 4
          %s279 = sadd.s32 %s142, %s278
          %s280 = sld [smem:[#allocation7 + %s279]]
          %s281 = sld [smem:[#allocation8 + %s279]]
          %s282 = smul.addr %s280, 16
          %s283 = scalar_lea.hbm %s3, %s282
          %s284 = scalar_lea.vmem [#allocation2], %s278
          // Predicated region
          $region68: #{transe_score.1} parent=32 // pred_check
            _
          $region69: #{transe_score.1} parent=32 // pred_check_branch
            %286 = sbr.rel target = $region71
          $region70: #{transe_score.1} parent=32 // pred_region
            %287 = sst [smem:[#allocation12]] [#allocation29]
            %288 = sst [smem:[#allocation13]] [#allocation28]
          $region71: #{transe_score.1} parent=32 // pred_fallthru
            _
          %290 = shalt.err (0)
          %s292 = sshll.u32 %s284, 4
          %s293 = int_to_ptr.vmem [resolvable:$true] %s292
          %295 = dma.hbm_to_vmem [thread:$0]  %s283, 16, %s293, [#allocation5]
          %s296 = smul.addr %s281, 16
          %s297 = scalar_lea.hbm %s3, %s296
          %s298 = scalar_lea.vmem [#allocation3], %s278
          // Predicated region
          $region72: #{transe_score.1} parent=32 // pred_check
            _
          $region73: #{transe_score.1} parent=32 // pred_check_branch
            %300 = sbr.rel target = $region75
          $region74: #{transe_score.1} parent=32 // pred_region
            %301 = sst [smem:[#allocation12]] [#allocation31]
            %302 = sst [smem:[#allocation13]] [#allocation30]
          $region75: #{transe_score.1} parent=32 // pred_fallthru
            _
          %304 = shalt.err (0)
          %s306 = sshll.u32 %s298, 4
          %s307 = int_to_ptr.vmem [resolvable:$true] %s306
          %309 = dma.hbm_to_vmem [thread:$0]  %s297, 16, %s307, %s170
          %s310 = sadd.s32 %s149, 5
          %s311 = sadd.s32 %s142, %s310
          %s312 = sld [smem:[#allocation7 + %s311]]
          %s313 = sld [smem:[#allocation8 + %s311]]
          %s314 = smul.addr %s312, 16
          %s315 = scalar_lea.hbm %s3, %s314
          %s316 = scalar_lea.vmem [#allocation2], %s310
          // Predicated region
          $region76: #{transe_score.1} parent=32 // pred_check
            _
          $region77: #{transe_score.1} parent=32 // pred_check_branch
            %318 = sbr.rel target = $region79
          $region78: #{transe_score.1} parent=32 // pred_region
            %319 = sst [smem:[#allocation12]] [#allocation33]
            %320 = sst [smem:[#allocation13]] [#allocation32]
          $region79: #{transe_score.1} parent=32 // pred_fallthru
            _
          %322 = shalt.err (0)
          %s324 = sshll.u32 %s316, 4
          %s325 = int_to_ptr.vmem [resolvable:$true] %s324
          %327 = dma.hbm_to_vmem [thread:$0]  %s315, 16, %s325, [#allocation5]
          %s328 = smul.addr %s313, 16
          %s329 = scalar_lea.hbm %s3, %s328
          %s330 = scalar_lea.vmem [#allocation3], %s310
          // Predicated region
          $region80: #{transe_score.1} parent=32 // pred_check
            _
          $region81: #{transe_score.1} parent=32 // pred_check_branch
            %332 = sbr.rel target = $region83
          $region82: #{transe_score.1} parent=32 // pred_region
            %333 = sst [smem:[#allocation12]] [#allocation35]
            %334 = sst [smem:[#allocation13]] [#allocation34]
          $region83: #{transe_score.1} parent=32 // pred_fallthru
            _
          %336 = shalt.err (0)
          %s338 = sshll.u32 %s330, 4
          %s339 = int_to_ptr.vmem [resolvable:$true] %s338
          %341 = dma.hbm_to_vmem [thread:$0]  %s329, 16, %s339, %s170
          %s342 = sadd.s32 %s149, 6
          %s343 = sadd.s32 %s142, %s342
          %s344 = sld [smem:[#allocation7 + %s343]]
          %s345 = sld [smem:[#allocation8 + %s343]]
          %s346 = smul.addr %s344, 16
          %s347 = scalar_lea.hbm %s3, %s346
          %s348 = scalar_lea.vmem [#allocation2], %s342
          // Predicated region
          $region84: #{transe_score.1} parent=32 // pred_check
            _
          $region85: #{transe_score.1} parent=32 // pred_check_branch
            %350 = sbr.rel target = $region87
          $region86: #{transe_score.1} parent=32 // pred_region
            %351 = sst [smem:[#allocation12]] [#allocation37]
            %352 = sst [smem:[#allocation13]] [#allocation36]
          $region87: #{transe_score.1} parent=32 // pred_fallthru
            _
          %354 = shalt.err (0)
          %s356 = sshll.u32 %s348, 4
          %s357 = int_to_ptr.vmem [resolvable:$true] %s356
          %359 = dma.hbm_to_vmem [thread:$0]  %s347, 16, %s357, [#allocation5]
          %s360 = smul.addr %s345, 16
          %s361 = scalar_lea.hbm %s3, %s360
          %s362 = scalar_lea.vmem [#allocation3], %s342
          // Predicated region
          $region88: #{transe_score.1} parent=32 // pred_check
            _
          $region89: #{transe_score.1} parent=32 // pred_check_branch
            %364 = sbr.rel target = $region91
          $region90: #{transe_score.1} parent=32 // pred_region
            %365 = sst [smem:[#allocation12]] [#allocation39]
            %366 = sst [smem:[#allocation13]] [#allocation38]
          $region91: #{transe_score.1} parent=32 // pred_fallthru
            _
          %368 = shalt.err (0)
          %s370 = sshll.u32 %s362, 4
          %s371 = int_to_ptr.vmem [resolvable:$true] %s370
          %373 = dma.hbm_to_vmem [thread:$0]  %s361, 16, %s371, %s170
          %s374 = sadd.s32 %s149, 7
          %s375 = sadd.s32 %s142, %s374
          %s376 = sld [smem:[#allocation7 + %s375]]
          %s377 = sld [smem:[#allocation8 + %s375]]
          %s378 = smul.addr %s376, 16
          %s379 = scalar_lea.hbm %s3, %s378
          %s380 = scalar_lea.vmem [#allocation2], %s374
          // Predicated region
          $region92: #{transe_score.1} parent=32 // pred_check
            _
          $region93: #{transe_score.1} parent=32 // pred_check_branch
            %382 = sbr.rel target = $region95
          $region94: #{transe_score.1} parent=32 // pred_region
            %383 = sst [smem:[#allocation12]] [#allocation41]
            %384 = sst [smem:[#allocation13]] [#allocation40]
          $region95: #{transe_score.1} parent=32 // pred_fallthru
            _
          %386 = shalt.err (0)
          %s388 = sshll.u32 %s380, 4
          %s389 = int_to_ptr.vmem [resolvable:$true] %s388
          %391 = dma.hbm_to_vmem [thread:$0]  %s379, 16, %s389, [#allocation5]
          %s392 = smul.addr %s377, 16
          %s393 = scalar_lea.hbm %s3, %s392
          %s394 = scalar_lea.vmem [#allocation3], %s374
          // Predicated region
          $region96: #{transe_score.1} parent=32 // pred_check
            _
          $region97: #{transe_score.1} parent=32 // pred_check_branch
            %396 = sbr.rel target = $region99
          $region98: #{transe_score.1} parent=32 // pred_region
            %397 = sst [smem:[#allocation12]] [#allocation43]
            %398 = sst [smem:[#allocation13]] [#allocation42]
          $region99: #{transe_score.1} parent=32 // pred_fallthru
            _
          %400 = shalt.err (0)
          %s402 = sshll.u32 %s394, 4
          %s403 = int_to_ptr.vmem [resolvable:$true] %s402
          %405 = dma.hbm_to_vmem [thread:$0]  %s393, 16, %s403, %s170
        $region33: #{transe_score.1} parent=27 // loop_footer
          %s148 = sadd.s32 1, %s144
        $region34: #{transe_score.1} parent=27 // loop_footer_branch
          %143 = sbr.rel target = $region30
        $region35: #{transe_score.1} parent=27 // loop_exit
          _
      $region28: #{transe_score.1} parent=23 // pred_fallthru
        _
      %s406 = sadd.s32 %s35, 1
      %p407 = scmp.lt.s32.totalorder %s406, 2
      // Predicated region
      $region100: #{transe_score.1} parent=23 // pred_check
        %p408 = pneg %p407
      $region101: #{transe_score.1} parent=23 // pred_check_branch
        %410 = sbr.rel (%p408) target = $region103
      $region102: #{transe_score.1} parent=23 // pred_region
        %s411 = smul.u32 %s34, 2
        %s412 = sadd.s32 %s411, %s35
        %s413 = sadd.s32 %s412, 1
        %p414 = scmp.lt.s32.totalorder %s406, 0
        %s415 = ssub.s32 0, %s406
        %s416 = scalar_select %p414, %s415, %s406
        %s417 = sand.u32 %s416, 1
        %s418 = ssub.s32 0, %s417
        %s419 = scalar_select %p414, %s418, %s417
        %p420 = scmp.ne.s32.totalorder %s419, 0
        %p421 = scmp.lt.s32.totalorder %s419, 0
        %p422 = pnand %p421, %p420
        %p423 = pneg %p422
        %s424 = sadd.s32 %s419, 2
        %s425 = scalar_select %p423, %s424, %s419
        %s426 = smul.u32 %s413, 16
        loop: start=0, step=1, limit=2
        $region104: #{transe_score.1} parent=102 // loop_pre_header
          _
        $region105: #{transe_score.1} parent=102 // loop_header
          %s428 = sphi 0, %s432
          %p429 = scmp.ge.s32.totalorder %s428, 2
        $region106: #{transe_score.1} parent=102 // loop_header_branch
          %431 = sbr.rel (%p429) target = $region110
        $region107: #{transe_score.1} parent=102 // loop_body
          %s433 = smul.u32 %s428, 8
          %s434 = sadd.s32 %s426, %s433
          %s435 = sld [smem:[#allocation7 + %s434]]
          %s436 = sld [smem:[#allocation8 + %s434]]
          %s437 = smul.addr %s435, 16
          %s438 = scalar_lea.hbm %s3, %s437
          %s439 = smul.u32 %s425, 16
          %s440 = sadd.s32 %s433, %s439
          %s441 = scalar_lea.vmem [#allocation2], %s440
          %s442 = smul.u32 %s425, 2
          %s443 = scalar_lea.sflag [#allocation5], %s442
          // Predicated region
          $region111: #{transe_score.1} parent=107 // pred_check
            _
          $region112: #{transe_score.1} parent=107 // pred_check_branch
            %445 = sbr.rel target = $region114
          $region113: #{transe_score.1} parent=107 // pred_region
            %446 = sst [smem:[#allocation12]] [#allocation45]
            %447 = sst [smem:[#allocation13]] [#allocation44]
          $region114: #{transe_score.1} parent=107 // pred_fallthru
            _
          %449 = shalt.err (0)
          %s451 = sshll.u32 %s441, 4
          %s452 = int_to_ptr.vmem [resolvable:$true] %s451
          %454 = dma.hbm_to_vmem [thread:$0]  %s438, 16, %s452, %s443
          %s455 = smul.addr %s436, 16
          %s456 = scalar_lea.hbm %s3, %s455
          %s457 = scalar_lea.vmem [#allocation3], %s440
          %s458 = sadd.s32 1, %s442
          %s459 = scalar_lea.sflag [#allocation5], %s458
          // Predicated region
          $region115: #{transe_score.1} parent=107 // pred_check
            _
          $region116: #{transe_score.1} parent=107 // pred_check_branch
            %461 = sbr.rel target = $region118
          $region117: #{transe_score.1} parent=107 // pred_region
            %462 = sst [smem:[#allocation12]] [#allocation47]
            %463 = sst [smem:[#allocation13]] [#allocation46]
          $region118: #{transe_score.1} parent=107 // pred_fallthru
            _
          %465 = shalt.err (0)
          %s467 = sshll.u32 %s457, 4
          %s468 = int_to_ptr.vmem [resolvable:$true] %s467
          %470 = dma.hbm_to_vmem [thread:$0]  %s456, 16, %s468, %s459
          %s471 = sadd.s32 %s433, 1
          %s472 = sadd.s32 %s426, %s471
          %s473 = sld [smem:[#allocation7 + %s472]]
          %s474 = sld [smem:[#allocation8 + %s472]]
          %s475 = smul.addr %s473, 16
          %s476 = scalar_lea.hbm %s3, %s475
          %s477 = sadd.s32 %s471, %s439
          %s478 = scalar_lea.vmem [#allocation2], %s477
          // Predicated region
          $region119: #{transe_score.1} parent=107 // pred_check
            _
          $region120: #{transe_score.1} parent=107 // pred_check_branch
            %480 = sbr.rel target = $region122
          $region121: #{transe_score.1} parent=107 // pred_region
            %481 = sst [smem:[#allocation12]] [#allocation49]
            %482 = sst [smem:[#allocation13]] [#allocation48]
          $region122: #{transe_score.1} parent=107 // pred_fallthru
            _
          %484 = shalt.err (0)
          %s486 = sshll.u32 %s478, 4
          %s487 = int_to_ptr.vmem [resolvable:$true] %s486
          %489 = dma.hbm_to_vmem [thread:$0]  %s476, 16, %s487, %s443
          %s490 = smul.addr %s474, 16
          %s491 = scalar_lea.hbm %s3, %s490
          %s492 = scalar_lea.vmem [#allocation3], %s477
          // Predicated region
          $region123: #{transe_score.1} parent=107 // pred_check
            _
          $region124: #{transe_score.1} parent=107 // pred_check_branch
            %494 = sbr.rel target = $region126
          $region125: #{transe_score.1} parent=107 // pred_region
            %495 = sst [smem:[#allocation12]] [#allocation51]
            %496 = sst [smem:[#allocation13]] [#allocation50]
          $region126: #{transe_score.1} parent=107 // pred_fallthru
            _
          %498 = shalt.err (0)
          %s500 = sshll.u32 %s492, 4
          %s501 = int_to_ptr.vmem [resolvable:$true] %s500
          %503 = dma.hbm_to_vmem [thread:$0]  %s491, 16, %s501, %s459
          %s504 = sadd.s32 %s433, 2
          %s505 = sadd.s32 %s426, %s504
          %s506 = sld [smem:[#allocation7 + %s505]]
          %s507 = sld [smem:[#allocation8 + %s505]]
          %s508 = smul.addr %s506, 16
          %s509 = scalar_lea.hbm %s3, %s508
          %s510 = sadd.s32 %s504, %s439
          %s511 = scalar_lea.vmem [#allocation2], %s510
          // Predicated region
          $region127: #{transe_score.1} parent=107 // pred_check
            _
          $region128: #{transe_score.1} parent=107 // pred_check_branch
            %513 = sbr.rel target = $region130
          $region129: #{transe_score.1} parent=107 // pred_region
            %514 = sst [smem:[#allocation12]] [#allocation53]
            %515 = sst [smem:[#allocation13]] [#allocation52]
          $region130: #{transe_score.1} parent=107 // pred_fallthru
            _
          %517 = shalt.err (0)
          %s519 = sshll.u32 %s511, 4
          %s520 = int_to_ptr.vmem [resolvable:$true] %s519
          %522 = dma.hbm_to_vmem [thread:$0]  %s509, 16, %s520, %s443
          %s523 = smul.addr %s507, 16
          %s524 = scalar_lea.hbm %s3, %s523
          %s525 = scalar_lea.vmem [#allocation3], %s510
          // Predicated region
          $region131: #{transe_score.1} parent=107 // pred_check
            _
          $region132: #{transe_score.1} parent=107 // pred_check_branch
            %527 = sbr.rel target = $region134
          $region133: #{transe_score.1} parent=107 // pred_region
            %528 = sst [smem:[#allocation12]] [#allocation55]
            %529 = sst [smem:[#allocation13]] [#allocation54]
          $region134: #{transe_score.1} parent=107 // pred_fallthru
            _
          %531 = shalt.err (0)
          %s533 = sshll.u32 %s525, 4
          %s534 = int_to_ptr.vmem [resolvable:$true] %s533
          %536 = dma.hbm_to_vmem [thread:$0]  %s524, 16, %s534, %s459
          %s537 = sadd.s32 %s433, 3
          %s538 = sadd.s32 %s426, %s537
          %s539 = sld [smem:[#allocation7 + %s538]]
          %s540 = sld [smem:[#allocation8 + %s538]]
          %s541 = smul.addr %s539, 16
          %s542 = scalar_lea.hbm %s3, %s541
          %s543 = sadd.s32 %s537, %s439
          %s544 = scalar_lea.vmem [#allocation2], %s543
          // Predicated region
          $region135: #{transe_score.1} parent=107 // pred_check
            _
          $region136: #{transe_score.1} parent=107 // pred_check_branch
            %546 = sbr.rel target = $region138
          $region137: #{transe_score.1} parent=107 // pred_region
            %547 = sst [smem:[#allocation12]] [#allocation57]
            %548 = sst [smem:[#allocation13]] [#allocation56]
          $region138: #{transe_score.1} parent=107 // pred_fallthru
            _
          %550 = shalt.err (0)
          %s552 = sshll.u32 %s544, 4
          %s553 = int_to_ptr.vmem [resolvable:$true] %s552
          %555 = dma.hbm_to_vmem [thread:$0]  %s542, 16, %s553, %s443
          %s556 = smul.addr %s540, 16
          %s557 = scalar_lea.hbm %s3, %s556
          %s558 = scalar_lea.vmem [#allocation3], %s543
          // Predicated region
          $region139: #{transe_score.1} parent=107 // pred_check
            _
          $region140: #{transe_score.1} parent=107 // pred_check_branch
            %560 = sbr.rel target = $region142
          $region141: #{transe_score.1} parent=107 // pred_region
            %561 = sst [smem:[#allocation12]] [#allocation59]
            %562 = sst [smem:[#allocation13]] [#allocation58]
          $region142: #{transe_score.1} parent=107 // pred_fallthru
            _
          %564 = shalt.err (0)
          %s566 = sshll.u32 %s558, 4
          %s567 = int_to_ptr.vmem [resolvable:$true] %s566
          %569 = dma.hbm_to_vmem [thread:$0]  %s557, 16, %s567, %s459
          %s570 = sadd.s32 %s433, 4
          %s571 = sadd.s32 %s426, %s570
          %s572 = sld [smem:[#allocation7 + %s571]]
          %s573 = sld [smem:[#allocation8 + %s571]]
          %s574 = smul.addr %s572, 16
          %s575 = scalar_lea.hbm %s3, %s574
          %s576 = sadd.s32 %s570, %s439
          %s577 = scalar_lea.vmem [#allocation2], %s576
          // Predicated region
          $region143: #{transe_score.1} parent=107 // pred_check
            _
          $region144: #{transe_score.1} parent=107 // pred_check_branch
            %579 = sbr.rel target = $region146
          $region145: #{transe_score.1} parent=107 // pred_region
            %580 = sst [smem:[#allocation12]] [#allocation61]
            %581 = sst [smem:[#allocation13]] [#allocation60]
          $region146: #{transe_score.1} parent=107 // pred_fallthru
            _
          %583 = shalt.err (0)
          %s585 = sshll.u32 %s577, 4
          %s586 = int_to_ptr.vmem [resolvable:$true] %s585
          %588 = dma.hbm_to_vmem [thread:$0]  %s575, 16, %s586, %s443
          %s589 = smul.addr %s573, 16
          %s590 = scalar_lea.hbm %s3, %s589
          %s591 = scalar_lea.vmem [#allocation3], %s576
          // Predicated region
          $region147: #{transe_score.1} parent=107 // pred_check
            _
          $region148: #{transe_score.1} parent=107 // pred_check_branch
            %593 = sbr.rel target = $region150
          $region149: #{transe_score.1} parent=107 // pred_region
            %594 = sst [smem:[#allocation12]] [#allocation63]
            %595 = sst [smem:[#allocation13]] [#allocation62]
          $region150: #{transe_score.1} parent=107 // pred_fallthru
            _
          %597 = shalt.err (0)
          %s599 = sshll.u32 %s591, 4
          %s600 = int_to_ptr.vmem [resolvable:$true] %s599
          %602 = dma.hbm_to_vmem [thread:$0]  %s590, 16, %s600, %s459
          %s603 = sadd.s32 %s433, 5
          %s604 = sadd.s32 %s426, %s603
          %s605 = sld [smem:[#allocation7 + %s604]]
          %s606 = sld [smem:[#allocation8 + %s604]]
          %s607 = smul.addr %s605, 16
          %s608 = scalar_lea.hbm %s3, %s607
          %s609 = sadd.s32 %s603, %s439
          %s610 = scalar_lea.vmem [#allocation2], %s609
          // Predicated region
          $region151: #{transe_score.1} parent=107 // pred_check
            _
          $region152: #{transe_score.1} parent=107 // pred_check_branch
            %612 = sbr.rel target = $region154
          $region153: #{transe_score.1} parent=107 // pred_region
            %613 = sst [smem:[#allocation12]] [#allocation65]
            %614 = sst [smem:[#allocation13]] [#allocation64]
          $region154: #{transe_score.1} parent=107 // pred_fallthru
            _
          %616 = shalt.err (0)
          %s618 = sshll.u32 %s610, 4
          %s619 = int_to_ptr.vmem [resolvable:$true] %s618
          %621 = dma.hbm_to_vmem [thread:$0]  %s608, 16, %s619, %s443
          %s622 = smul.addr %s606, 16
          %s623 = scalar_lea.hbm %s3, %s622
          %s624 = scalar_lea.vmem [#allocation3], %s609
          // Predicated region
          $region155: #{transe_score.1} parent=107 // pred_check
            _
          $region156: #{transe_score.1} parent=107 // pred_check_branch
            %626 = sbr.rel target = $region158
          $region157: #{transe_score.1} parent=107 // pred_region
            %627 = sst [smem:[#allocation12]] [#allocation67]
            %628 = sst [smem:[#allocation13]] [#allocation66]
          $region158: #{transe_score.1} parent=107 // pred_fallthru
            _
          %630 = shalt.err (0)
          %s632 = sshll.u32 %s624, 4
          %s633 = int_to_ptr.vmem [resolvable:$true] %s632
          %635 = dma.hbm_to_vmem [thread:$0]  %s623, 16, %s633, %s459
          %s636 = sadd.s32 %s433, 6
          %s637 = sadd.s32 %s426, %s636
          %s638 = sld [smem:[#allocation7 + %s637]]
          %s639 = sld [smem:[#allocation8 + %s637]]
          %s640 = smul.addr %s638, 16
          %s641 = scalar_lea.hbm %s3, %s640
          %s642 = sadd.s32 %s636, %s439
          %s643 = scalar_lea.vmem [#allocation2], %s642
          // Predicated region
          $region159: #{transe_score.1} parent=107 // pred_check
            _
          $region160: #{transe_score.1} parent=107 // pred_check_branch
            %645 = sbr.rel target = $region162
          $region161: #{transe_score.1} parent=107 // pred_region
            %646 = sst [smem:[#allocation12]] [#allocation69]
            %647 = sst [smem:[#allocation13]] [#allocation68]
          $region162: #{transe_score.1} parent=107 // pred_fallthru
            _
          %649 = shalt.err (0)
          %s651 = sshll.u32 %s643, 4
          %s652 = int_to_ptr.vmem [resolvable:$true] %s651
          %654 = dma.hbm_to_vmem [thread:$0]  %s641, 16, %s652, %s443
          %s655 = smul.addr %s639, 16
          %s656 = scalar_lea.hbm %s3, %s655
          %s657 = scalar_lea.vmem [#allocation3], %s642
          // Predicated region
          $region163: #{transe_score.1} parent=107 // pred_check
            _
          $region164: #{transe_score.1} parent=107 // pred_check_branch
            %659 = sbr.rel target = $region166
          $region165: #{transe_score.1} parent=107 // pred_region
            %660 = sst [smem:[#allocation12]] [#allocation71]
            %661 = sst [smem:[#allocation13]] [#allocation70]
          $region166: #{transe_score.1} parent=107 // pred_fallthru
            _
          %663 = shalt.err (0)
          %s665 = sshll.u32 %s657, 4
          %s666 = int_to_ptr.vmem [resolvable:$true] %s665
          %668 = dma.hbm_to_vmem [thread:$0]  %s656, 16, %s666, %s459
          %s669 = sadd.s32 %s433, 7
          %s670 = sadd.s32 %s426, %s669
          %s671 = sld [smem:[#allocation7 + %s670]]
          %s672 = sld [smem:[#allocation8 + %s670]]
          %s673 = smul.addr %s671, 16
          %s674 = scalar_lea.hbm %s3, %s673
          %s675 = sadd.s32 %s669, %s439
          %s676 = scalar_lea.vmem [#allocation2], %s675
          // Predicated region
          $region167: #{transe_score.1} parent=107 // pred_check
            _
          $region168: #{transe_score.1} parent=107 // pred_check_branch
            %678 = sbr.rel target = $region170
          $region169: #{transe_score.1} parent=107 // pred_region
            %679 = sst [smem:[#allocation12]] [#allocation73]
            %680 = sst [smem:[#allocation13]] [#allocation72]
          $region170: #{transe_score.1} parent=107 // pred_fallthru
            _
          %682 = shalt.err (0)
          %s684 = sshll.u32 %s676, 4
          %s685 = int_to_ptr.vmem [resolvable:$true] %s684
          %687 = dma.hbm_to_vmem [thread:$0]  %s674, 16, %s685, %s443
          %s688 = smul.addr %s672, 16
          %s689 = scalar_lea.hbm %s3, %s688
          %s690 = scalar_lea.vmem [#allocation3], %s675
          // Predicated region
          $region171: #{transe_score.1} parent=107 // pred_check
            _
          $region172: #{transe_score.1} parent=107 // pred_check_branch
            %692 = sbr.rel target = $region174
          $region173: #{transe_score.1} parent=107 // pred_region
            %693 = sst [smem:[#allocation12]] [#allocation75]
            %694 = sst [smem:[#allocation13]] [#allocation74]
          $region174: #{transe_score.1} parent=107 // pred_fallthru
            _
          %696 = shalt.err (0)
          %s698 = sshll.u32 %s690, 4
          %s699 = int_to_ptr.vmem [resolvable:$true] %s698
          %701 = dma.hbm_to_vmem [thread:$0]  %s689, 16, %s699, %s459
        $region108: #{transe_score.1} parent=102 // loop_footer
          %s432 = sadd.s32 1, %s428
        $region109: #{transe_score.1} parent=102 // loop_footer_branch
          %427 = sbr.rel target = $region105
        $region110: #{transe_score.1} parent=102 // loop_exit
          _
      $region103: #{transe_score.1} parent=23 // pred_fallthru
        _
      %s702 = smul.u32 %s34, 2
      %s703 = sadd.s32 %s702, %s35
      %s704 = smul.u32 %s703, 16
      loop: start=0, step=1, limit=2
      $region175: #{transe_score.1} parent=23 // loop_pre_header
        _
      $region176: #{transe_score.1} parent=23 // loop_header
        %s706 = sphi 0, %s710
        %p707 = scmp.ge.s32.totalorder %s706, 2
      $region177: #{transe_score.1} parent=23 // loop_header_branch
        %709 = sbr.rel (%p707) target = $region181
      $region178: #{transe_score.1} parent=23 // loop_body
        %s711 = smul.u32 %s706, 8
        %s712 = sadd.s32 %s704, %s711
        %s713 = sld [smem:[#allocation9 + %s712]]
        %s714 = scalar_lea.vmem %s4, %s713
        %v715 = vld [vmem:[%s714] sm:$0x1]
        %s716 = scalar_lea.vmem [#allocation4], %s711
        %717 = vst [vmem:[%s716] sm:$0x1] %v715
        %s718 = sadd.s32 %s711, 1
        %s719 = sadd.s32 %s704, %s718
        %s720 = sld [smem:[#allocation9 + %s719]]
        %s721 = scalar_lea.vmem %s4, %s720
        %v722 = vld [vmem:[%s721] sm:$0x1]
        %s723 = scalar_lea.vmem [#allocation4], %s718
        %724 = vst [vmem:[%s723] sm:$0x1] %v722
        %s725 = sadd.s32 %s711, 2
        %s726 = sadd.s32 %s704, %s725
        %s727 = sld [smem:[#allocation9 + %s726]]
        %s728 = scalar_lea.vmem %s4, %s727
        %v729 = vld [vmem:[%s728] sm:$0x1]
        %s730 = scalar_lea.vmem [#allocation4], %s725
        %731 = vst [vmem:[%s730] sm:$0x1] %v729
        %s732 = sadd.s32 %s711, 3
        %s733 = sadd.s32 %s704, %s732
        %s734 = sld [smem:[#allocation9 + %s733]]
        %s735 = scalar_lea.vmem %s4, %s734
        %v736 = vld [vmem:[%s735] sm:$0x1]
        %s737 = scalar_lea.vmem [#allocation4], %s732
        %738 = vst [vmem:[%s737] sm:$0x1] %v736
        %s739 = sadd.s32 %s711, 4
        %s740 = sadd.s32 %s704, %s739
        %s741 = sld [smem:[#allocation9 + %s740]]
        %s742 = scalar_lea.vmem %s4, %s741
        %v743 = vld [vmem:[%s742] sm:$0x1]
        %s744 = scalar_lea.vmem [#allocation4], %s739
        %745 = vst [vmem:[%s744] sm:$0x1] %v743
        %s746 = sadd.s32 %s711, 5
        %s747 = sadd.s32 %s704, %s746
        %s748 = sld [smem:[#allocation9 + %s747]]
        %s749 = scalar_lea.vmem %s4, %s748
        %v750 = vld [vmem:[%s749] sm:$0x1]
        %s751 = scalar_lea.vmem [#allocation4], %s746
        %752 = vst [vmem:[%s751] sm:$0x1] %v750
        %s753 = sadd.s32 %s711, 6
        %s754 = sadd.s32 %s704, %s753
        %s755 = sld [smem:[#allocation9 + %s754]]
        %s756 = scalar_lea.vmem %s4, %s755
        %v757 = vld [vmem:[%s756] sm:$0x1]
        %s758 = scalar_lea.vmem [#allocation4], %s753
        %759 = vst [vmem:[%s758] sm:$0x1] %v757
        %s760 = sadd.s32 %s711, 7
        %s761 = sadd.s32 %s704, %s760
        %s762 = sld [smem:[#allocation9 + %s761]]
        %s763 = scalar_lea.vmem %s4, %s762
        %v764 = vld [vmem:[%s763] sm:$0x1]
        %s765 = scalar_lea.vmem [#allocation4], %s760
        %766 = vst [vmem:[%s765] sm:$0x1] %v764
      $region179: #{transe_score.1} parent=23 // loop_footer
        %s710 = sadd.s32 1, %s706
      $region180: #{transe_score.1} parent=23 // loop_footer_branch
        %705 = sbr.rel target = $region176
      $region181: #{transe_score.1} parent=23 // loop_exit
        _
      %p767 = scmp.lt.s32.totalorder %s35, 0
      %s768 = ssub.s32 0, %s35
      %s769 = scalar_select %p767, %s768, %s35
      %s770 = sand.u32 %s769, 1
      %s771 = ssub.s32 0, %s770
      %s772 = scalar_select %p767, %s771, %s770
      %p773 = scmp.ne.s32.totalorder %s772, 0
      %p774 = scmp.lt.s32.totalorder %s772, 0
      %p775 = pnand %p774, %p773
      %p776 = pneg %p775
      %s777 = sadd.s32 %s772, 2
      %s778 = scalar_select %p776, %s777, %s772
      %s779 = smul.u32 %s778, 16
      %s780 = scalar_lea.vmem [#allocation2], %s779
      %s781 = smul.u32 %s778, 2
      %s782 = scalar_lea.sflag [#allocation5], %s781
      %s783 = smul.u32 16, 1
      %s784 = sshll.u32 %s783, 4
      %785 = dma.done %s782, %s784
      %s786 = scalar_lea.vmem [#allocation3], %s779
      %s787 = sadd.s32 1, %s781
      %s788 = scalar_lea.sflag [#allocation5], %s787
      %s789 = sshll.u32 %s783, 4
      %790 = dma.done %s788, %s789
      %v791 = vld [vmem:[%s780] sm:$0xff]
      %v792 = vld [vmem:[%s780 + $0x8] sm:$0xff]
      %v793 = vld [vmem:[%s786] sm:$0xff]
      %v794 = vld [vmem:[%s786 + $0x8] sm:$0xff]
      %v795 = vld [vmem:[#allocation4] sm:$0xff]
      %v796 = vld [vmem:[#allocation4 + $0x8] sm:$0xff]
      %v797 = vadd.f32 %v791, %v795
      %v798 = vadd.f32 %v792, %v796
      %v799 = vsub.f32 %v797, %v793
      %v800 = vsub.f32 %v798, %v794
      %v801 = vand.u32 2147483647, %v799
      %v802 = vand.u32 2147483647, %v800
      %803 = vadd.xlane.f32.xlu0 %v801
      %v804 = vpop.xlane.xlu0 %803
      %805 = vadd.xlane.f32.xlu0 %v802
      %v806 = vpop.xlane.xlu0 %805
      %vm807 = vcmask 7168
      %808 = vst.msk [vmem:[%s134] sm:$0xff] %vm807, %v804
      %809 = vst.msk [vmem:[%s134 + $0x8] sm:$0xff] %vm807, %v806
      %s810 = smul.u32 %s34, 2
      %s811 = sadd.s32 %s810, %s35
      %s812 = smul.u32 2, %s811
      %p813 = scmp.lt.s32.totalorder %s812, 7
      %s814 = scalar_select %p813, %s812, 7
      %s815 = smul.addr %s814, 8
      %s816 = scalar_lea.vmem %s5, %s815
      // Predicated region
      $region182: #{transe_score.1} parent=23 // pred_check
        %p817 = pneg %p85
      $region183: #{transe_score.1} parent=23 // pred_check_branch
        %819 = sbr.rel (%p817) target = $region185
      $region184: #{transe_score.1} parent=23 // pred_region
        %s820 = smul.u32 %s34, 2
        %s821 = sadd.s32 %s820, %s35
        %s822 = smul.u32 2, %s821
      $region185: #{transe_score.1} parent=23 // pred_fallthru
        _
    $region24: #{transe_score.1} parent=5 // pred_fallthru
      _
    %p823 = scmp.le.s32.totalorder 2, %s25
    // Predicated region
    $region186: #{transe_score.1} parent=5 // pred_check
      %p824 = pneg %p823
    $region187: #{transe_score.1} parent=5 // pred_check_branch
      %826 = sbr.rel (%p824) target = $region189
    $region188: #{transe_score.1} parent=5 // pred_region
      %s827 = ssub.s32 %s25, 2
      // Predicated region
      $region190: #{transe_score.1} parent=188 // pred_check
        %p828 = pneg %p91
      $region191: #{transe_score.1} parent=188 // pred_check_branch
        %830 = sbr.rel (%p828) target = $region193
      $region192: #{transe_score.1} parent=188 // pred_region
        %s831 = smul.u32 %s36, 2
        %s832 = sadd.s32 %s831, %s37
        %s833 = smul.u32 2, %s832
        %p834 = scmp.lt.s32.totalorder %s833, 7
        %s835 = scalar_select %p834, %s833, 7
        %s836 = smul.addr %s835, 8
        %s837 = scalar_lea.vmem %s5, %s836
      $region193: #{transe_score.1} parent=188 // pred_fallthru
        _
    $region189: #{transe_score.1} parent=5 // pred_fallthru
      _
  $region6: #{transe_score.1} parent=0 // loop_footer
    %s29 = sadd.s32 1, %s25
  $region7: #{transe_score.1} parent=0 // loop_footer_branch
    %24 = sbr.rel target = $region3
  $region8: #{transe_score.1} parent=0 // loop_exit
    _
  %838 = vsyncmov [#allocation5]
  %s839 = vpop.sfrf %838
  %p840 = scmp.eq.s32.totalorder %s839, 0
  %p841 = pneg %p840
  %843 = shalt.err (%p841)
  %s844 = scalar_lea.sflag [#allocation5], 1
  %845 = vsyncmov %s844
  %s846 = vpop.sfrf %845
  %p847 = scmp.eq.s32.totalorder %s846, 0
  %p848 = pneg %p847
  %850 = shalt.err (%p848)
  %s851 = scalar_lea.sflag [#allocation5], 2
  %852 = vsyncmov %s851
  %s853 = vpop.sfrf %852
  %p854 = scmp.eq.s32.totalorder %s853, 0
  %p855 = pneg %p854
  %857 = shalt.err (%p855)
  %s858 = scalar_lea.sflag [#allocation5], 3
  %859 = vsyncmov %s858
  %s860 = vpop.sfrf %859
  %p861 = scmp.eq.s32.totalorder %s860, 0
  %p862 = pneg %p861
  %864 = shalt.err (%p862)

</llo_original>
